<compile_context>
chip_gen: v7x
topology: tpu7x:2x2x1
jax: 0.10.0
libtpu: 0.0.40
codegen_flags: <defaults>
</compile_context>

<pallas_src>
import jax
import jax.numpy as jnp
from jax.experimental import pallas as pl
from jax.experimental.pallas import tpu as pltpu

INPUT_SIZE = 795
H1 = 128
H2 = 64
OUT = 1
OUT_PAD = 128         # lane-dense output slab width
BN_EPS = 1e-5


def _round_up(n, m):
    return ((n + m - 1) // m) * m


def _mlp_kernel(x_ref, w1_ref, b1_ref, w2_ref, b2_ref, w3_ref, b3_ref, o_ref):
    # ---- fc1 (BN1 folded in) + relu ----------------------------------------
    x = x_ref[...].astype(jnp.bfloat16)           # cast on-chip; f32 stays in HBM
    h = jnp.dot(x, w1_ref[...],
                preferred_element_type=jnp.float32) + b1_ref[...]
    h = jnp.maximum(h, 0.0)
    # dropout(p=0.3): identity in eval mode
    # TODO(synk): training-mode dropout (pltpu.prng_random_bits mask) not wired in.

    # ---- fc2 (BN2 folded in) + relu ----------------------------------------
    h = jnp.dot(h.astype(jnp.bfloat16), w2_ref[...],
                preferred_element_type=jnp.float32) + b2_ref[...]
    h = jnp.maximum(h, 0.0)
    # dropout(p=0.3): identity in eval mode

    # ---- fc3 (output padded to 128 lanes for an unmasked, lane-dense store) -
    out = jnp.dot(h.astype(jnp.bfloat16), w3_ref[...],
                  preferred_element_type=jnp.float32) + b3_ref[...]
    o_ref[...] = out.astype(o_ref.dtype)


def _fold_params(params):
    """Fold BatchNorm running stats + biases into the linear layers (eval mode)."""
    (w1, b1, g1, be1, m1, v1,
     w2, b2, g2, be2, m2, v2,
     w3, b3) = params

    scale1 = g1 * jax.lax.rsqrt(v1 + BN_EPS)                       # (1, H1)
    w1f = (w1 * scale1).astype(jnp.bfloat16)                       # (IN, H1)
    b1f = ((b1 - m1) * scale1 + be1).astype(jnp.float32)           # (1, H1)
    scale2 = g2 * jax.lax.rsqrt(v2 + BN_EPS)                       # (1, H2)
    w2f = (w2 * scale2).astype(jnp.bfloat16)                       # (H1, H2)
    b2f = ((b2 - m2) * scale2 + be2).astype(jnp.float32)           # (1, H2)
    w3p = jnp.pad(w3, ((0, 0), (0, OUT_PAD - OUT))).astype(jnp.bfloat16)   # (H2, 128)
    b3p = jnp.pad(b3, ((0, 0), (0, OUT_PAD - OUT))).astype(jnp.float32)    # (1, 128)
    return w1f, b1f, w2f, b2f, w3p, b3p


def _run(x, weights, batch_tile, pad_input):
    w1f, b1f, w2f, b2f, w3p, b3p = weights
    B, F = x.shape

    if pad_input:
        # Fallback path: aligned K (795 -> 896). Costs one extra HBM pass on x.
        K = _round_up(F, 128)
        x = jnp.pad(x, ((0, 0), (0, K - F)))
        w1f = jnp.pad(w1f, ((0, K - F), (0, 0)))
    else:
        K = F  # stream raw [B, 795] f32; unaligned contraction handled by Mosaic

    grid = (pl.cdiv(B, batch_tile),)

    full = lambda arr: pl.BlockSpec(arr.shape, lambda i: (0, 0))
    in_specs = [
        pl.BlockSpec((batch_tile, K), lambda i: (i, 0)),   # x (streamed per tile)
        full(w1f), full(b1f),
        full(w2f), full(b2f),
        full(w3p), full(b3p),
    ]
    out_specs = pl.BlockSpec((batch_tile, OUT_PAD), lambda i: (i, 0))

    out_padded = pl.pallas_call(
        _mlp_kernel,
        out_shape=jax.ShapeDtypeStruct((B, OUT_PAD), jnp.float32),
        grid_spec=pltpu.PrefetchScalarGridSpec(
            num_scalar_prefetch=0,
            grid=grid,
            in_specs=in_specs,
            out_specs=out_specs,
        ),
        compiler_params=pltpu.CompilerParams(
            dimension_semantics=("parallel",)),
    )(x, w1f, b1f, w2f, b2f, w3p, b3p)

    return out_padded[:, :OUT]


def classification_model_forward(x, params, *, batch_tile=None):
    """x: [B, INPUT_SIZE] float32 -> [B, 1] float32 (inference mode)."""
    B, F = x.shape
    assert F == INPUT_SIZE

    weights = _fold_params(params)

    if batch_tile is None:
        # 1024 rows * 795 f32 ~= 3.2 MiB per x buffer -> <9 MiB total even
        # double-buffered; per-step DMA (~2.5 us) well above the ~0.35 us
        # per-grid-step overhead.
        batch_tile = min(1024, _round_up(B, 8))
    assert batch_tile % 8 == 0, "batch_tile must be a multiple of 8 (sublanes)"

    try:
        return _run(x, weights, batch_tile, pad_input=False)
    except Exception:
        # Unaligned-K lowering not available on this Mosaic build: use the
        # validated padded-K path instead.
        return _run(x, weights, batch_tile, pad_input=True)


def init_params(key):
    """Deterministic synthetic parameters matching ClassificationModel.__init__ shapes."""
    ks = jax.random.split(key, 12)

    def linear(kw, kb, fan_in, fan_out):
        bound = 1.0 / jnp.sqrt(fan_in)
        # PyTorch stores weight as [out, in]; we keep [in, out] for x @ W.
        w = jax.random.uniform(kw, (fan_in, fan_out), jnp.float32, -bound, bound)
        b = jax.random.uniform(kb, (1, fan_out), jnp.float32, -bound, bound)
        return w, b

    w1, b1 = linear(ks[0], ks[1], INPUT_SIZE, H1)
    w2, b2 = linear(ks[2], ks[3], H1, H2)
    w3, b3 = linear(ks[4], ks[5], H2, OUT)

    def bn(kg, kb, km, kv, n):
        gamma = 1.0 + 0.1 * jax.random.normal(kg, (1, n), jnp.float32)
        beta = 0.1 * jax.random.normal(kb, (1, n), jnp.float32)
        mean = 0.1 * jax.random.normal(km, (1, n), jnp.float32)
        var = jax.random.uniform(kv, (1, n), jnp.float32, 0.5, 1.5)
        return gamma, beta, mean, var

    g1, be1, m1, v1 = bn(ks[6], ks[7], ks[8], ks[9], H1)
    g2, be2, m2, v2 = bn(ks[10], ks[11], ks[6], ks[7], H2)  # reuse keys deterministically

    return (w1, b1, g1, be1, m1, v1,
            w2, b2, g2, be2, m2, v2,
            w3, b3)


def reference_forward(x, params):
    """Full-precision (f32) reference of the original module in eval mode."""
    (w1, b1, g1, be1, m1, v1,
     w2, b2, g2, be2, m2, v2,
     w3, b3) = params
    h = x @ w1 + b1
    h = (h - m1) * (g1 / jnp.sqrt(v1 + BN_EPS)) + be1
    h = jnp.maximum(h, 0.0)
    h = h @ w2 + b2
    h = (h - m2) * (g2 / jnp.sqrt(v2 + BN_EPS)) + be2
    h = jnp.maximum(h, 0.0)
    return h @ w3 + b3


if __name__ == "__main__":
    key = jax.random.PRNGKey(0)
    kx, kp = jax.random.split(key)

    B = 8
    x = jax.random.normal(kx, (B, INPUT_SIZE), jnp.float32)
    params = init_params(kp)

    out = classification_model_forward(x, params)
    out = jax.block_until_ready(out)

    ref = reference_forward(x, params)
    assert out.shape == (B, 1)
    # bf16 weights/activations with f32 accumulation: loosen tolerance vs f32 ref.
    assert jnp.allclose(out, ref, atol=5e-2, rtol=5e-2), "mismatch vs reference"

    print("KERNEL_OK")
</pallas_src>

<mosaic_0001>
module attributes {stable_mosaic.version = 11 : i64} {
  func.func @_mlp_kernel(%arg0: i32, %arg1: memref<8x795xf32, #tpu.memory_space<vmem>>, %arg2: memref<795x128xbf16, #tpu.memory_space<vmem>>, %arg3: memref<1x128xf32, #tpu.memory_space<vmem>>, %arg4: memref<128x64xbf16, #tpu.memory_space<vmem>>, %arg5: memref<1x64xf32, #tpu.memory_space<vmem>>, %arg6: memref<64x128xbf16, #tpu.memory_space<vmem>>, %arg7: memref<1x128xf32, #tpu.memory_space<vmem>>, %arg8: memref<8x128xf32, #tpu.memory_space<vmem>>) attributes {dimension_semantics = [#tpu.dimension_semantics<parallel>], iteration_bounds = array<i64: 1>, scalar_prefetch = 0 : i64, scratch_operands = 0 : i64, tpu.core_type = #tpu.core_type<tc>, window_params = [{transform_indices = @transform_0, window_bounds = array<i64: 8, 795>}, {pipeline_mode = #tpu.pipeline_mode<synchronous>, transform_indices = @transform_1, window_bounds = array<i64: 795, 128>}, {pipeline_mode = #tpu.pipeline_mode<synchronous>, transform_indices = @transform_2, window_bounds = array<i64: 1, 128>}, {pipeline_mode = #tpu.pipeline_mode<synchronous>, transform_indices = @transform_3, window_bounds = array<i64: 128, 64>}, {pipeline_mode = #tpu.pipeline_mode<synchronous>, transform_indices = @transform_4, window_bounds = array<i64: 1, 64>}, {pipeline_mode = #tpu.pipeline_mode<synchronous>, transform_indices = @transform_5, window_bounds = array<i64: 64, 128>}, {pipeline_mode = #tpu.pipeline_mode<synchronous>, transform_indices = @transform_6, window_bounds = array<i64: 1, 128>}, {transform_indices = @transform_7, window_bounds = array<i64: 8, 128>}]} {
    %c0 = arith.constant 0 : index
    %c0_0 = arith.constant 0 : index
    %0 = vector.load %arg1[%c0, %c0_0] : memref<8x795xf32, #tpu.memory_space<vmem>>, vector<8x795xf32>
    %1 = arith.truncf %0 : vector<8x795xf32> to vector<8x795xbf16>
    %c0_1 = arith.constant 0 : index
    %c0_2 = arith.constant 0 : index
    %2 = vector.load %arg2[%c0_1, %c0_2] : memref<795x128xbf16, #tpu.memory_space<vmem>>, vector<795x128xbf16>
    %cst = arith.constant dense<0.000000e+00> : vector<8x128xf32>
    %3 = tpu.matmul %1, %2, %cst {dimension_numbers = #tpu.dot_dimension_numbers<[1], [0], [0], [1], [0, 0, 1, 1], [], []>} : vector<8x795xbf16>, vector<795x128xbf16>, vector<8x128xf32> -> vector<8x128xf32>
    %c0_3 = arith.constant 0 : index
    %c0_4 = arith.constant 0 : index
    %4 = vector.load %arg3[%c0_3, %c0_4] : memref<1x128xf32, #tpu.memory_space<vmem>>, vector<1x128xf32>
    %5 = vector.broadcast %4 : vector<1x128xf32> to vector<8x128xf32>
    %6 = arith.addf %3, %5 : vector<8x128xf32>
    %cst_5 = arith.constant 0.000000e+00 : f32
    %7 = vector.broadcast %cst_5 : f32 to vector<8x128xf32>
    %8 = arith.maximumf %6, %7 : vector<8x128xf32>
    %9 = arith.truncf %8 : vector<8x128xf32> to vector<8x128xbf16>
    %c0_6 = arith.constant 0 : index
    %c0_7 = arith.constant 0 : index
    %10 = vector.load %arg4[%c0_6, %c0_7] : memref<128x64xbf16, #tpu.memory_space<vmem>>, vector<128x64xbf16>
    %cst_8 = arith.constant dense<0.000000e+00> : vector<8x64xf32>
    %11 = tpu.matmul %9, %10, %cst_8 {dimension_numbers = #tpu.dot_dimension_numbers<[1], [0], [0], [1], [0, 0, 1, 1], [], []>} : vector<8x128xbf16>, vector<128x64xbf16>, vector<8x64xf32> -> vector<8x64xf32>
    %c0_9 = arith.constant 0 : index
    %c0_10 = arith.constant 0 : index
    %12 = vector.load %arg5[%c0_9, %c0_10] : memref<1x64xf32, #tpu.memory_space<vmem>>, vector<1x64xf32>
    %13 = vector.broadcast %12 : vector<1x64xf32> to vector<8x64xf32>
    %14 = arith.addf %11, %13 : vector<8x64xf32>
    %cst_11 = arith.constant 0.000000e+00 : f32
    %15 = vector.broadcast %cst_11 : f32 to vector<8x64xf32>
    %16 = arith.maximumf %14, %15 : vector<8x64xf32>
    %17 = arith.truncf %16 : vector<8x64xf32> to vector<8x64xbf16>
    %c0_12 = arith.constant 0 : index
    %c0_13 = arith.constant 0 : index
    %18 = vector.load %arg6[%c0_12, %c0_13] : memref<64x128xbf16, #tpu.memory_space<vmem>>, vector<64x128xbf16>
    %cst_14 = arith.constant dense<0.000000e+00> : vector<8x128xf32>
    %19 = tpu.matmul %17, %18, %cst_14 {dimension_numbers = #tpu.dot_dimension_numbers<[1], [0], [0], [1], [0, 0, 1, 1], [], []>} : vector<8x64xbf16>, vector<64x128xbf16>, vector<8x128xf32> -> vector<8x128xf32>
    %c0_15 = arith.constant 0 : index
    %c0_16 = arith.constant 0 : index
    %20 = vector.load %arg7[%c0_15, %c0_16] : memref<1x128xf32, #tpu.memory_space<vmem>>, vector<1x128xf32>
    %21 = vector.broadcast %20 : vector<1x128xf32> to vector<8x128xf32>
    %22 = arith.addf %19, %21 : vector<8x128xf32>
    %c0_17 = arith.constant 0 : index
    %c0_18 = arith.constant 0 : index
    %23 = vector.load %arg8[%c0_17, %c0_18] : memref<8x128xf32, #tpu.memory_space<vmem>>, vector<8x128xf32>
    tpu.vector_store %arg8[%c0_17, %c0_18], %22 {strides = array<i32>} : memref<8x128xf32, #tpu.memory_space<vmem>>, vector<8x128xf32>,
    return
  }
  func.func @transform_0(%arg0: i32) -> (i32, i32) {
    %c0_i32 = arith.constant 0 : i32
    %c0_i32_0 = arith.constant 0 : i32
    return %arg0, %c0_i32 : i32, i32
  }
  func.func @transform_1(%arg0: i32) -> (i32, i32) {
    %c0_i32 = arith.constant 0 : i32
    %c0_i32_0 = arith.constant 0 : i32
    %c0_i32_1 = arith.constant 0 : i32
    return %c0_i32, %c0_i32_0 : i32, i32
  }
  func.func @transform_2(%arg0: i32) -> (i32, i32) {
    %c0_i32 = arith.constant 0 : i32
    %c0_i32_0 = arith.constant 0 : i32
    %c0_i32_1 = arith.constant 0 : i32
    return %c0_i32, %c0_i32_0 : i32, i32
  }
  func.func @transform_3(%arg0: i32) -> (i32, i32) {
    %c0_i32 = arith.constant 0 : i32
    %c0_i32_0 = arith.constant 0 : i32
    %c0_i32_1 = arith.constant 0 : i32
    return %c0_i32, %c0_i32_0 : i32, i32
  }
  func.func @transform_4(%arg0: i32) -> (i32, i32) {
    %c0_i32 = arith.constant 0 : i32
    %c0_i32_0 = arith.constant 0 : i32
    %c0_i32_1 = arith.constant 0 : i32
    return %c0_i32, %c0_i32_0 : i32, i32
  }
  func.func @transform_5(%arg0: i32) -> (i32, i32) {
    %c0_i32 = arith.constant 0 : i32
    %c0_i32_0 = arith.constant 0 : i32
    %c0_i32_1 = arith.constant 0 : i32
    return %c0_i32, %c0_i32_0 : i32, i32
  }
  func.func @transform_6(%arg0: i32) -> (i32, i32) {
    %c0_i32 = arith.constant 0 : i32
    %c0_i32_0 = arith.constant 0 : i32
    %c0_i32_1 = arith.constant 0 : i32
    return %c0_i32, %c0_i32_0 : i32, i32
  }
  func.func @transform_7(%arg0: i32) -> (i32, i32) {
    %c0_i32 = arith.constant 0 : i32
    %c0_i32_0 = arith.constant 0 : i32
    return %arg0, %c0_i32 : i32, i32
  }
}

module attributes {stable_mosaic.version = 11 : i64} {
  func.func @_mlp_kernel(%arg0: i32, %arg1: memref<8x896xf32, #tpu.memory_space<vmem>>, %arg2: memref<896x128xbf16, #tpu.memory_space<vmem>>, %arg3: memref<1x128xf32, #tpu.memory_space<vmem>>, %arg4: memref<128x64xbf16, #tpu.memory_space<vmem>>, %arg5: memref<1x64xf32, #tpu.memory_space<vmem>>, %arg6: memref<64x128xbf16, #tpu.memory_space<vmem>>, %arg7: memref<1x128xf32, #tpu.memory_space<vmem>>, %arg8: memref<8x128xf32, #tpu.memory_space<vmem>>) attributes {dimension_semantics = [#tpu.dimension_semantics<parallel>], iteration_bounds = array<i64: 1>, scalar_prefetch = 0 : i64, scratch_operands = 0 : i64, tpu.core_type = #tpu.core_type<tc>, window_params = [{transform_indices = @transform_0, window_bounds = array<i64: 8, 896>}, {pipeline_mode = #tpu.pipeline_mode<synchronous>, transform_indices = @transform_1, window_bounds = array<i64: 896, 128>}, {pipeline_mode = #tpu.pipeline_mode<synchronous>, transform_indices = @transform_2, window_bounds = array<i64: 1, 128>}, {pipeline_mode = #tpu.pipeline_mode<synchronous>, transform_indices = @transform_3, window_bounds = array<i64: 128, 64>}, {pipeline_mode = #tpu.pipeline_mode<synchronous>, transform_indices = @transform_4, window_bounds = array<i64: 1, 64>}, {pipeline_mode = #tpu.pipeline_mode<synchronous>, transform_indices = @transform_5, window_bounds = array<i64: 64, 128>}, {pipeline_mode = #tpu.pipeline_mode<synchronous>, transform_indices = @transform_6, window_bounds = array<i64: 1, 128>}, {transform_indices = @transform_7, window_bounds = array<i64: 8, 128>}]} {
    %c0 = arith.constant 0 : index
    %c0_0 = arith.constant 0 : index
    %0 = vector.load %arg1[%c0, %c0_0] : memref<8x896xf32, #tpu.memory_space<vmem>>, vector<8x896xf32>
    %1 = arith.truncf %0 : vector<8x896xf32> to vector<8x896xbf16>
    %c0_1 = arith.constant 0 : index
    %c0_2 = arith.constant 0 : index
    %2 = vector.load %arg2[%c0_1, %c0_2] : memref<896x128xbf16, #tpu.memory_space<vmem>>, vector<896x128xbf16>
    %cst = arith.constant dense<0.000000e+00> : vector<8x128xf32>
    %3 = tpu.matmul %1, %2, %cst {dimension_numbers = #tpu.dot_dimension_numbers<[1], [0], [0], [1], [0, 0, 1, 1], [], []>} : vector<8x896xbf16>, vector<896x128xbf16>, vector<8x128xf32> -> vector<8x128xf32>
    %c0_3 = arith.constant 0 : index
    %c0_4 = arith.constant 0 : index
    %4 = vector.load %arg3[%c0_3, %c0_4] : memref<1x128xf32, #tpu.memory_space<vmem>>, vector<1x128xf32>
    %5 = vector.broadcast %4 : vector<1x128xf32> to vector<8x128xf32>
    %6 = arith.addf %3, %5 : vector<8x128xf32>
    %cst_5 = arith.constant 0.000000e+00 : f32
    %7 = vector.broadcast %cst_5 : f32 to vector<8x128xf32>
    %8 = arith.maximumf %6, %7 : vector<8x128xf32>
    %9 = arith.truncf %8 : vector<8x128xf32> to vector<8x128xbf16>
    %c0_6 = arith.constant 0 : index
    %c0_7 = arith.constant 0 : index
    %10 = vector.load %arg4[%c0_6, %c0_7] : memref<128x64xbf16, #tpu.memory_space<vmem>>, vector<128x64xbf16>
    %cst_8 = arith.constant dense<0.000000e+00> : vector<8x64xf32>
    %11 = tpu.matmul %9, %10, %cst_8 {dimension_numbers = #tpu.dot_dimension_numbers<[1], [0], [0], [1], [0, 0, 1, 1], [], []>} : vector<8x128xbf16>, vector<128x64xbf16>, vector<8x64xf32> -> vector<8x64xf32>
    %c0_9 = arith.constant 0 : index
    %c0_10 = arith.constant 0 : index
    %12 = vector.load %arg5[%c0_9, %c0_10] : memref<1x64xf32, #tpu.memory_space<vmem>>, vector<1x64xf32>
    %13 = vector.broadcast %12 : vector<1x64xf32> to vector<8x64xf32>
    %14 = arith.addf %11, %13 : vector<8x64xf32>
    %cst_11 = arith.constant 0.000000e+00 : f32
    %15 = vector.broadcast %cst_11 : f32 to vector<8x64xf32>
    %16 = arith.maximumf %14, %15 : vector<8x64xf32>
    %17 = arith.truncf %16 : vector<8x64xf32> to vector<8x64xbf16>
    %c0_12 = arith.constant 0 : index
    %c0_13 = arith.constant 0 : index
    %18 = vector.load %arg6[%c0_12, %c0_13] : memref<64x128xbf16, #tpu.memory_space<vmem>>, vector<64x128xbf16>
    %cst_14 = arith.constant dense<0.000000e+00> : vector<8x128xf32>
    %19 = tpu.matmul %17, %18, %cst_14 {dimension_numbers = #tpu.dot_dimension_numbers<[1], [0], [0], [1], [0, 0, 1, 1], [], []>} : vector<8x64xbf16>, vector<64x128xbf16>, vector<8x128xf32> -> vector<8x128xf32>
    %c0_15 = arith.constant 0 : index
    %c0_16 = arith.constant 0 : index
    %20 = vector.load %arg7[%c0_15, %c0_16] : memref<1x128xf32, #tpu.memory_space<vmem>>, vector<1x128xf32>
    %21 = vector.broadcast %20 : vector<1x128xf32> to vector<8x128xf32>
    %22 = arith.addf %19, %21 : vector<8x128xf32>
    %c0_17 = arith.constant 0 : index
    %c0_18 = arith.constant 0 : index
    %23 = vector.load %arg8[%c0_17, %c0_18] : memref<8x128xf32, #tpu.memory_space<vmem>>, vector<8x128xf32>
    tpu.vector_store %arg8[%c0_17, %c0_18], %22 {strides = array<i32>} : memref<8x128xf32, #tpu.memory_space<vmem>>, vector<8x128xf32>,
    return
  }
  func.func @transform_0(%arg0: i32) -> (i32, i32) {
    %c0_i32 = arith.constant 0 : i32
    %c0_i32_0 = arith.constant 0 : i32
    return %arg0, %c0_i32 : i32, i32
  }
  func.func @transform_1(%arg0: i32) -> (i32, i32) {
    %c0_i32 = arith.constant 0 : i32
    %c0_i32_0 = arith.constant 0 : i32
    %c0_i32_1 = arith.constant 0 : i32
    return %c0_i32, %c0_i32_0 : i32, i32
  }
  func.func @transform_2(%arg0: i32) -> (i32, i32) {
    %c0_i32 = arith.constant 0 : i32
    %c0_i32_0 = arith.constant 0 : i32
    %c0_i32_1 = arith.constant 0 : i32
    return %c0_i32, %c0_i32_0 : i32, i32
  }
  func.func @transform_3(%arg0: i32) -> (i32, i32) {
    %c0_i32 = arith.constant 0 : i32
    %c0_i32_0 = arith.constant 0 : i32
    %c0_i32_1 = arith.constant 0 : i32
    return %c0_i32, %c0_i32_0 : i32, i32
  }
  func.func @transform_4(%arg0: i32) -> (i32, i32) {
    %c0_i32 = arith.constant 0 : i32
    %c0_i32_0 = arith.constant 0 : i32
    %c0_i32_1 = arith.constant 0 : i32
    return %c0_i32, %c0_i32_0 : i32, i32
  }
  func.func @transform_5(%arg0: i32) -> (i32, i32) {
    %c0_i32 = arith.constant 0 : i32
    %c0_i32_0 = arith.constant 0 : i32
    %c0_i32_1 = arith.constant 0 : i32
    return %c0_i32, %c0_i32_0 : i32, i32
  }
  func.func @transform_6(%arg0: i32) -> (i32, i32) {
    %c0_i32 = arith.constant 0 : i32
    %c0_i32_0 = arith.constant 0 : i32
    %c0_i32_1 = arith.constant 0 : i32
    return %c0_i32, %c0_i32_0 : i32, i32
  }
  func.func @transform_7(%arg0: i32) -> (i32, i32) {
    %c0_i32 = arith.constant 0 : i32
    %c0_i32_0 = arith.constant 0 : i32
    return %arg0, %c0_i32 : i32, i32
  }
}

</mosaic_0001>

<llo_original>
// kernel: tpu_custom_call.1
$region0: #{tpu_custom_call.1}
  #allocation0 [shape = 'u32[]', space=smem, size = 0x4, offset = 0x4, fixed_abs, tag = 'smem constant byte address 0x4 - core index']
  #allocation1 [shape = 'u32[144,128]{1,0:T(1,128)}', space=vmem, size = 0x12000, scoped, tag = 'internal scratch']
  %s0 = inlined_call_operand.vmem [shape: f32[8,795], index: 0, kind: input, shape index: {}]
  %s1 = inlined_call_operand.hbm [shape: bf16[795,128], index: 1, kind: input, shape index: {}]
  %s2 = inlined_call_operand.vmem [shape: f32[1,128], index: 2, kind: input, shape index: {}]
  %s3 = inlined_call_operand.vmem [shape: bf16[128,64], index: 3, kind: input, shape index: {}]
  %s4 = inlined_call_operand.vmem [shape: f32[1,64], index: 4, kind: input, shape index: {}]
  %s5 = inlined_call_operand.vmem [shape: bf16[64,128], index: 5, kind: input, shape index: {}]
  %s6 = inlined_call_operand.vmem [shape: f32[1,128], index: 6, kind: input, shape index: {}]
  %s7 = inlined_call_operand.hbm [shape: f32[8,128], index: 7, kind: output, shape index: {}]
  %s8 = sld [smem:[#allocation0]]
  $region42: #{tpu_custom_call.1} parent=0
    _
  %s10 = ssub.s32 1, %s8
  %s11 = scalar_select 0, %s10, %s8
  $region1: #{tpu_custom_call.1} parent=0
    #allocation2 [shape = 'u8[204800]{0}', space=vmem, size = 0x32000, scoped, tag = 'input window, operand 1, single buffered']
    #allocation3 [shape = 's32[1]{0}', space=sflag, size = 0x4, scoped, tag = 'scoped memory for tpu_custom_call.1']
    #allocation4 [shape = 's32[1]{0}', space=sflag, size = 0x4, scoped, tag = 'scoped memory for tpu_custom_call.1']
    #allocation5 [shape = 'u8[4096]{0}', space=vmem, size = 0x1000, scoped, tag = 'output window, operand 0, single buffered']
    %12 = vsyncpa [#allocation3], 0
    %13 = vsyncpa [#allocation4], 0
    // Predicated region
    $region2: #{tpu_custom_call.1} parent=1 // pred_check
      _
    $region3: #{tpu_custom_call.1} parent=1 // pred_check_branch
      %15 = sbr.rel (0) target = $region5
    $region4: #{tpu_custom_call.1} parent=1 // pred_region
      _
    $region5: #{tpu_custom_call.1} parent=1 // pred_fallthru
      _
    // Predicated region
    $region6: #{tpu_custom_call.1} parent=1 // pred_check
      _
    $region7: #{tpu_custom_call.1} parent=1 // pred_check_branch
      %17 = sbr.rel (0) target = $region9
    $region8: #{tpu_custom_call.1} parent=1 // pred_region
      %s19 = ssub.s32 6400, 6400
      %20 = vsyncadd [#allocation3], %s19
      %s21 = sshll.u32 [#allocation2], 4
      %s22 = int_to_ptr.vmem [resolvable:$true] %s21
      %27 = dma.hbm_to_vmem [thread:$0]  %s1, 6400, %s22, [#allocation3], 64, 64, 4
    $region9: #{tpu_custom_call.1} parent=1 // pred_fallthru
      _
    // Predicated region
    $region10: #{tpu_custom_call.1} parent=1 // pred_check
      _
    $region11: #{tpu_custom_call.1} parent=1 // pred_check_branch
      %29 = sbr.rel (0) target = $region13
    $region12: #{tpu_custom_call.1} parent=1 // pred_region
      _
    $region13: #{tpu_custom_call.1} parent=1 // pred_fallthru
      _
    // Predicated region
    $region14: #{tpu_custom_call.1} parent=1 // pred_check
      _
    $region15: #{tpu_custom_call.1} parent=1 // pred_check_branch
      %31 = sbr.rel (0) target = $region17
    $region16: #{tpu_custom_call.1} parent=1 // pred_region
      _
    $region17: #{tpu_custom_call.1} parent=1 // pred_fallthru
      _
    // Predicated region
    $region18: #{tpu_custom_call.1} parent=1 // pred_check
      _
    $region19: #{tpu_custom_call.1} parent=1 // pred_check_branch
      %33 = sbr.rel (0) target = $region21
    $region20: #{tpu_custom_call.1} parent=1 // pred_region
      _
    $region21: #{tpu_custom_call.1} parent=1 // pred_fallthru
      _
    // Predicated region
    $region22: #{tpu_custom_call.1} parent=1 // pred_check
      _
    $region23: #{tpu_custom_call.1} parent=1 // pred_check_branch
      %35 = sbr.rel (0) target = $region25
    $region24: #{tpu_custom_call.1} parent=1 // pred_region
      _
    $region25: #{tpu_custom_call.1} parent=1 // pred_fallthru
      _
    // Predicated region
    $region26: #{tpu_custom_call.1} parent=1 // pred_check
      _
    $region27: #{tpu_custom_call.1} parent=1 // pred_check_branch
      %37 = sbr.rel (0) target = $region29
    $region28: #{tpu_custom_call.1} parent=1 // pred_region
      _
    $region29: #{tpu_custom_call.1} parent=1 // pred_fallthru
      _
    // Predicated region
    $region30: #{tpu_custom_call.1} parent=1 // pred_check
      _
    $region31: #{tpu_custom_call.1} parent=1 // pred_check_branch
      %39 = sbr.rel (0) target = $region33
    $region32: #{tpu_custom_call.1} parent=1 // pred_region
      %40 = dma.done [#allocation3], 6400
    $region33: #{tpu_custom_call.1} parent=1 // pred_fallthru
      _
    %v42 = vld [vmem:[%s0] sm:$0xff]
    %v43 = vld [vmem:[%s0 + $0x8] sm:$0xff]
    %v44 = vld [vmem:[%s0 + $0x10] sm:$0xff]
    %v45 = vld [vmem:[%s0 + $0x18] sm:$0xff]
    %v46 = vld [vmem:[%s0 + $0x20] sm:$0xff]
    %v47 = vld [vmem:[%s0 + $0x28] sm:$0xff]
    %v48 = vld [vmem:[%s0 + $0x30] sm:$0xff]
    %v49 = vpack.c.bf16 %v42, %v42
    %v50 = vpack.c.bf16 %v43, %v43
    %v51 = vpack.c.bf16 %v44, %v44
    %v52 = vpack.c.bf16 %v45, %v45
    %v53 = vpack.c.bf16 %v46, %v46
    %v54 = vpack.c.bf16 %v47, %v47
    %v55 = vpack.c.bf16 %v48, %v48
    %v56 = vld [vmem:[#allocation2] sm:$0xf]
    %v57 = vld [vmem:[#allocation2 + $0x4] sm:$0xf]
    %v58 = vld [vmem:[#allocation2 + $0x8] sm:$0xf]
    %v59 = vld [vmem:[#allocation2 + $0xc] sm:$0xf]
    %v60 = vld [vmem:[#allocation2 + $0x10] sm:$0xf]
    %v61 = vld [vmem:[#allocation2 + $0x14] sm:$0xf]
    %v62 = vld [vmem:[#allocation2 + $0x18] sm:$0xf]
    %v63 = vld [vmem:[#allocation2 + $0x1c] sm:$0xf]
    %v64 = vld [vmem:[#allocation2 + $0x20] sm:$0xf]
    %v65 = vld [vmem:[#allocation2 + $0x24] sm:$0xf]
    %v66 = vld [vmem:[#allocation2 + $0x28] sm:$0xf]
    %v67 = vld [vmem:[#allocation2 + $0x2c] sm:$0xf]
    %v68 = vld [vmem:[#allocation2 + $0x30] sm:$0xf]
    %v69 = vld [vmem:[#allocation2 + $0x34] sm:$0xf]
    %v70 = vld [vmem:[#allocation2 + $0x38] sm:$0xf]
    %v71 = vld [vmem:[#allocation2 + $0x3c] sm:$0xf]
    %v72 = vld [vmem:[#allocation2 + $0x40] sm:$0xf]
    %v73 = vld [vmem:[#allocation2 + $0x44] sm:$0xf]
    %v74 = vld [vmem:[#allocation2 + $0x48] sm:$0xf]
    %v75 = vld [vmem:[#allocation2 + $0x4c] sm:$0xf]
    %v76 = vld [vmem:[#allocation2 + $0x50] sm:$0xf]
    %v77 = vld [vmem:[#allocation2 + $0x54] sm:$0xf]
    %v78 = vld [vmem:[#allocation2 + $0x58] sm:$0xf]
    %v79 = vld [vmem:[#allocation2 + $0x5c] sm:$0xf]
    %v80 = vld [vmem:[#allocation2 + $0x60] sm:$0xf]
    %v81 = vld [vmem:[#allocation2 + $0x64] sm:$0xf]
    %v82 = vld [vmem:[#allocation2 + $0x68] sm:$0xf]
    %v83 = vld [vmem:[#allocation2 + $0x6c] sm:$0xf]
    %v84 = vld [vmem:[#allocation2 + $0x70] sm:$0xf]
    %v85 = vld [vmem:[#allocation2 + $0x74] sm:$0xf]
    %v86 = vld [vmem:[#allocation2 + $0x78] sm:$0xf]
    %v87 = vld [vmem:[#allocation2 + $0x7c] sm:$0xf]
    %v88 = vld [vmem:[#allocation2 + $0x80] sm:$0xf]
    %v89 = vld [vmem:[#allocation2 + $0x84] sm:$0xf]
    %v90 = vld [vmem:[#allocation2 + $0x88] sm:$0xf]
    %v91 = vld [vmem:[#allocation2 + $0x8c] sm:$0xf]
    %v92 = vld [vmem:[#allocation2 + $0x90] sm:$0xf]
    %v93 = vld [vmem:[#allocation2 + $0x94] sm:$0xf]
    %v94 = vld [vmem:[#allocation2 + $0x98] sm:$0xf]
    %v95 = vld [vmem:[#allocation2 + $0x9c] sm:$0xf]
    %v96 = vld [vmem:[#allocation2 + $0xa0] sm:$0xf]
    %v97 = vld [vmem:[#allocation2 + $0xa4] sm:$0xf]
    %v98 = vld [vmem:[#allocation2 + $0xa8] sm:$0xf]
    %v99 = vld [vmem:[#allocation2 + $0xac] sm:$0xf]
    %v100 = vld [vmem:[#allocation2 + $0xb0] sm:$0xf]
    %v101 = vld [vmem:[#allocation2 + $0xb4] sm:$0xf]
    %v102 = vld [vmem:[#allocation2 + $0xb8] sm:$0xf]
    %v103 = vld [vmem:[#allocation2 + $0xbc] sm:$0xf]
    %v104 = vld [vmem:[#allocation2 + $0xc0] sm:$0xf]
    %v105 = vld [vmem:[#allocation2 + $0xc4] sm:$0xf]
    %v106 = vld [vmem:[#allocation2 + $0xc8] sm:$0xf]
    %v107 = vld [vmem:[#allocation2 + $0xcc] sm:$0xf]
    %v108 = vld [vmem:[#allocation2 + $0xd0] sm:$0xf]
    %v109 = vld [vmem:[#allocation2 + $0xd4] sm:$0xf]
    %v110 = vld [vmem:[#allocation2 + $0xd8] sm:$0xf]
    %v111 = vld [vmem:[#allocation2 + $0xdc] sm:$0xf]
    %v112 = vld [vmem:[#allocation2 + $0xe0] sm:$0xf]
    %v113 = vld [vmem:[#allocation2 + $0xe4] sm:$0xf]
    %v114 = vld [vmem:[#allocation2 + $0xe8] sm:$0xf]
    %v115 = vld [vmem:[#allocation2 + $0xec] sm:$0xf]
    %v116 = vld [vmem:[#allocation2 + $0xf0] sm:$0xf]
    %v117 = vld [vmem:[#allocation2 + $0xf4] sm:$0xf]
    %v118 = vld [vmem:[#allocation2 + $0xf8] sm:$0xf]
    %v119 = vld [vmem:[#allocation2 + $0xfc] sm:$0xf]
    %v120 = vld [vmem:[#allocation2 + $0x100] sm:$0xf]
    %v121 = vld [vmem:[#allocation2 + $0x104] sm:$0xf]
    %v122 = vld [vmem:[#allocation2 + $0x108] sm:$0xf]
    %v123 = vld [vmem:[#allocation2 + $0x10c] sm:$0xf]
    %v124 = vld [vmem:[#allocation2 + $0x110] sm:$0xf]
    %v125 = vld [vmem:[#allocation2 + $0x114] sm:$0xf]
    %v126 = vld [vmem:[#allocation2 + $0x118] sm:$0xf]
    %v127 = vld [vmem:[#allocation2 + $0x11c] sm:$0xf]
    %v128 = vld [vmem:[#allocation2 + $0x120] sm:$0xf]
    %v129 = vld [vmem:[#allocation2 + $0x124] sm:$0xf]
    %v130 = vld [vmem:[#allocation2 + $0x128] sm:$0xf]
    %v131 = vld [vmem:[#allocation2 + $0x12c] sm:$0xf]
    %v132 = vld [vmem:[#allocation2 + $0x130] sm:$0xf]
    %v133 = vld [vmem:[#allocation2 + $0x134] sm:$0xf]
    %v134 = vld [vmem:[#allocation2 + $0x138] sm:$0xf]
    %v135 = vld [vmem:[#allocation2 + $0x13c] sm:$0xf]
    %v136 = vld [vmem:[#allocation2 + $0x140] sm:$0xf]
    %v137 = vld [vmem:[#allocation2 + $0x144] sm:$0xf]
    %v138 = vld [vmem:[#allocation2 + $0x148] sm:$0xf]
    %v139 = vld [vmem:[#allocation2 + $0x14c] sm:$0xf]
    %v140 = vld [vmem:[#allocation2 + $0x150] sm:$0xf]
    %v141 = vld [vmem:[#allocation2 + $0x154] sm:$0xf]
    %v142 = vld [vmem:[#allocation2 + $0x158] sm:$0xf]
    %v143 = vld [vmem:[#allocation2 + $0x15c] sm:$0xf]
    %v144 = vld [vmem:[#allocation2 + $0x160] sm:$0xf]
    %v145 = vld [vmem:[#allocation2 + $0x164] sm:$0xf]
    %v146 = vld [vmem:[#allocation2 + $0x168] sm:$0xf]
    %v147 = vld [vmem:[#allocation2 + $0x16c] sm:$0xf]
    %v148 = vld [vmem:[#allocation2 + $0x170] sm:$0xf]
    %v149 = vld [vmem:[#allocation2 + $0x174] sm:$0xf]
    %v150 = vld [vmem:[#allocation2 + $0x178] sm:$0xf]
    %v151 = vld [vmem:[#allocation2 + $0x17c] sm:$0xf]
    %v152 = vld [vmem:[#allocation2 + $0x180] sm:$0xf]
    %v153 = vld [vmem:[#allocation2 + $0x184] sm:$0xf]
    %v154 = vld [vmem:[#allocation2 + $0x188] sm:$0xf]
    %v155 = vld [vmem:[#allocation2 + $0x18c] sm:$0x3]
    %v156 = vld [vmem:[%s2] sm:$0x1]
    %v158 = vlaneseq
    %v159 = vshrl.u32 %v158, 7
    %v160 = vsub.s32 0, %v159
    %v161 = vrot.slane %v156, %v160
    %v263 = vunpack.c.l.b16 %v56
    %v264 = vunpack.c.l.b16 %v57
    %v265 = vunpack.c.l.b16 %v58
    %v266 = vunpack.c.l.b16 %v59
    %v267 = vunpack.c.l.b16 %v60
    %v268 = vunpack.c.l.b16 %v61
    %v269 = vunpack.c.l.b16 %v62
    %v270 = vunpack.c.l.b16 %v63
    %v271 = vunpack.c.l.b16 %v64
    %v272 = vunpack.c.l.b16 %v65
    %v273 = vunpack.c.l.b16 %v66
    %v274 = vunpack.c.l.b16 %v67
    %v275 = vunpack.c.l.b16 %v68
    %v276 = vunpack.c.l.b16 %v69
    %v277 = vunpack.c.l.b16 %v70
    %v278 = vunpack.c.l.b16 %v71
    %v279 = vunpack.c.l.b16 %v72
    %v280 = vunpack.c.l.b16 %v73
    %v281 = vunpack.c.l.b16 %v74
    %v282 = vunpack.c.l.b16 %v75
    %v283 = vunpack.c.l.b16 %v76
    %v284 = vunpack.c.l.b16 %v77
    %v285 = vunpack.c.l.b16 %v78
    %v286 = vunpack.c.l.b16 %v79
    %v287 = vunpack.c.l.b16 %v80
    %v288 = vunpack.c.l.b16 %v81
    %v289 = vunpack.c.l.b16 %v82
    %v290 = vunpack.c.l.b16 %v83
    %v291 = vunpack.c.l.b16 %v84
    %v292 = vunpack.c.l.b16 %v85
    %v293 = vunpack.c.l.b16 %v86
    %v294 = vunpack.c.l.b16 %v87
    %v295 = vunpack.c.l.b16 %v88
    %v296 = vunpack.c.l.b16 %v89
    %v297 = vunpack.c.l.b16 %v90
    %v298 = vunpack.c.l.b16 %v91
    %v299 = vunpack.c.l.b16 %v92
    %v300 = vunpack.c.l.b16 %v93
    %v301 = vunpack.c.l.b16 %v94
    %v302 = vunpack.c.l.b16 %v95
    %v303 = vunpack.c.l.b16 %v96
    %v304 = vunpack.c.l.b16 %v97
    %v305 = vunpack.c.l.b16 %v98
    %v306 = vunpack.c.l.b16 %v99
    %v307 = vunpack.c.l.b16 %v100
    %v308 = vunpack.c.l.b16 %v101
    %v309 = vunpack.c.l.b16 %v102
    %v310 = vunpack.c.l.b16 %v103
    %v311 = vunpack.c.l.b16 %v104
    %v312 = vunpack.c.l.b16 %v105
    %v313 = vunpack.c.l.b16 %v106
    %v314 = vunpack.c.l.b16 %v107
    %v315 = vunpack.c.l.b16 %v108
    %v316 = vunpack.c.l.b16 %v109
    %v317 = vunpack.c.l.b16 %v110
    %v318 = vunpack.c.l.b16 %v111
    %v319 = vunpack.c.l.b16 %v112
    %v320 = vunpack.c.l.b16 %v113
    %v321 = vunpack.c.l.b16 %v114
    %v322 = vunpack.c.l.b16 %v115
    %v323 = vunpack.c.l.b16 %v116
    %v324 = vunpack.c.l.b16 %v117
    %v325 = vunpack.c.l.b16 %v118
    %v326 = vunpack.c.l.b16 %v119
    %v327 = vunpack.c.l.b16 %v120
    %v328 = vunpack.c.l.b16 %v121
    %v329 = vunpack.c.l.b16 %v122
    %v330 = vunpack.c.l.b16 %v123
    %v331 = vunpack.c.l.b16 %v124
    %v332 = vunpack.c.l.b16 %v125
    %v333 = vunpack.c.l.b16 %v126
    %v334 = vunpack.c.l.b16 %v127
    %v335 = vunpack.c.l.b16 %v128
    %v336 = vunpack.c.l.b16 %v129
    %v337 = vunpack.c.l.b16 %v130
    %v338 = vunpack.c.l.b16 %v131
    %v339 = vunpack.c.l.b16 %v132
    %v340 = vunpack.c.l.b16 %v133
    %v341 = vunpack.c.l.b16 %v134
    %v342 = vunpack.c.l.b16 %v135
    %v343 = vunpack.c.l.b16 %v136
    %v344 = vunpack.c.l.b16 %v137
    %v345 = vunpack.c.l.b16 %v138
    %v346 = vunpack.c.l.b16 %v139
    %v347 = vunpack.c.l.b16 %v140
    %v348 = vunpack.c.l.b16 %v141
    %v349 = vunpack.c.l.b16 %v142
    %v350 = vunpack.c.l.b16 %v143
    %v351 = vunpack.c.l.b16 %v144
    %v352 = vunpack.c.l.b16 %v145
    %v353 = vunpack.c.l.b16 %v146
    %v354 = vunpack.c.l.b16 %v147
    %v355 = vunpack.c.l.b16 %v148
    %v356 = vunpack.c.l.b16 %v149
    %v357 = vunpack.c.l.b16 %v150
    %v358 = vunpack.c.l.b16 %v151
    %v359 = vunpack.c.l.b16 %v152
    %v360 = vunpack.c.l.b16 %v153
    %v361 = vunpack.c.l.b16 %v154
    %v362 = vunpack.c.l.b16 %v155
    %v363 = vpack.c.b16 %v264, %v263
    %v364 = vpack.c.b16 %v266, %v265
    %v365 = vpack.c.b16 %v268, %v267
    %v366 = vpack.c.b16 %v270, %v269
    %v367 = vpack.c.b16 %v272, %v271
    %v368 = vpack.c.b16 %v274, %v273
    %v369 = vpack.c.b16 %v276, %v275
    %v370 = vpack.c.b16 %v278, %v277
    %v371 = vpack.c.b16 %v280, %v279
    %v372 = vpack.c.b16 %v282, %v281
    %v373 = vpack.c.b16 %v284, %v283
    %v374 = vpack.c.b16 %v286, %v285
    %v375 = vpack.c.b16 %v288, %v287
    %v376 = vpack.c.b16 %v290, %v289
    %v377 = vpack.c.b16 %v292, %v291
    %v378 = vpack.c.b16 %v294, %v293
    %v379 = vpack.c.b16 %v296, %v295
    %v380 = vpack.c.b16 %v298, %v297
    %v381 = vpack.c.b16 %v300, %v299
    %v382 = vpack.c.b16 %v302, %v301
    %v383 = vpack.c.b16 %v304, %v303
    %v384 = vpack.c.b16 %v306, %v305
    %v385 = vpack.c.b16 %v308, %v307
    %v386 = vpack.c.b16 %v310, %v309
    %v387 = vpack.c.b16 %v312, %v311
    %v388 = vpack.c.b16 %v314, %v313
    %v389 = vpack.c.b16 %v316, %v315
    %v390 = vpack.c.b16 %v318, %v317
    %v391 = vpack.c.b16 %v320, %v319
    %v392 = vpack.c.b16 %v322, %v321
    %v393 = vpack.c.b16 %v324, %v323
    %v394 = vpack.c.b16 %v326, %v325
    %v395 = vpack.c.b16 %v328, %v327
    %v396 = vpack.c.b16 %v330, %v329
    %v397 = vpack.c.b16 %v332, %v331
    %v398 = vpack.c.b16 %v334, %v333
    %v399 = vpack.c.b16 %v336, %v335
    %v400 = vpack.c.b16 %v338, %v337
    %v401 = vpack.c.b16 %v340, %v339
    %v402 = vpack.c.b16 %v342, %v341
    %v403 = vpack.c.b16 %v344, %v343
    %v404 = vpack.c.b16 %v346, %v345
    %v405 = vpack.c.b16 %v348, %v347
    %v406 = vpack.c.b16 %v350, %v349
    %v407 = vpack.c.b16 %v352, %v351
    %v408 = vpack.c.b16 %v354, %v353
    %v409 = vpack.c.b16 %v356, %v355
    %v410 = vpack.c.b16 %v358, %v357
    %v411 = vpack.c.b16 %v360, %v359
    %v412 = vpack.c.b16 %v362, %v361
    %vm462 = vcmask 220160
    %v464 = vsel %vm462, %v55, 0
    %vm466 = vcmask 1044480
    %vm467 = vcmask 1045504
    %v468 = vsel %vm466, 4294967295, 65535
    %v469 = vsel %vm467, %v468, 0
    %v471 = vand.u32 %v412, %v469
    %473 = vmatprep.subr.bf16.mxu0 0
    %474 = vmatpush1.bf16.msra.mxu0 %v363
    %475 = vmatprep.subr.bf16.mxu0 0
    %476 = vmatpush1.bf16.msra.mxu0 %v364
    %477 = vmatprep.subr.bf16.mxu0 0
    %478 = vmatpush1.bf16.msra.mxu0 %v365
    %479 = vmatprep.subr.bf16.mxu0 0
    %480 = vmatpush1.bf16.msra.mxu0 %v366
    %481 = vmatprep.subr.bf16.mxu0 0
    %482 = vmatpush1.bf16.msra.mxu0 %v367
    %483 = vmatprep.subr.bf16.mxu0 0
    %484 = vmatpush1.bf16.msra.mxu0 %v368
    %485 = vmatprep.subr.bf16.mxu0 0
    %486 = vmatpush1.bf16.msra.mxu0 %v369
    %487 = vmatprep.subr.bf16.mxu0 0
    %488 = vmatpush1.bf16.msra.mxu0 %v370
    %489 = vmatprep.subr.bf16.mxu0 0
    %490 = vmatpush1.bf16.msra.mxu0 %v371
    %491 = vmatprep.subr.bf16.mxu0 0
    %492 = vmatpush1.bf16.msra.mxu0 %v372
    %493 = vmatprep.subr.bf16.mxu0 0
    %494 = vmatpush1.bf16.msra.mxu0 %v373
    %495 = vmatprep.subr.bf16.mxu0 0
    %496 = vmatpush1.bf16.msra.mxu0 %v374
    %497 = vmatprep.subr.bf16.mxu0 0
    %498 = vmatpush1.bf16.msra.mxu0 %v375
    %499 = vmatprep.subr.bf16.mxu0 0
    %500 = vmatpush1.bf16.msra.mxu0 %v376
    %501 = vmatprep.subr.bf16.mxu0 0
    %502 = vmatpush1.bf16.msra.mxu0 %v377
    %503 = vmatprep.subr.bf16.mxu0 0
    %504 = vmatpush1.bf16.msra.mxu0 %v378
    %505 = vmatprep.mubr.bf16.mxu0 %v50
    %506 = vmatmul.mubr.bf16.gmra.mrb[0].mxu0 %v49
    %v507 = vpop.f32.mrb[0].mxu0
    %v508 = vadd.f32 %v161, %v507
    %v509 = vpop.f32.mrb[0].mxu0
    %v510 = vpop.f32.mrb[0].mxu0
    %v511 = vpop.f32.mrb[0].mxu0
    %512 = vdwg.mxu0
    %513 = vmatprep.subr.bf16.mxu0 0
    %514 = vmatpush1.bf16.msra.mxu0 %v379
    %515 = vmatprep.subr.bf16.mxu0 0
    %516 = vmatpush1.bf16.msra.mxu0 %v380
    %517 = vmatprep.subr.bf16.mxu0 0
    %518 = vmatpush1.bf16.msra.mxu0 %v381
    %519 = vmatprep.subr.bf16.mxu0 0
    %520 = vmatpush1.bf16.msra.mxu0 %v382
    %521 = vmatprep.subr.bf16.mxu0 0
    %522 = vmatpush1.bf16.msra.mxu0 %v383
    %523 = vmatprep.subr.bf16.mxu0 0
    %524 = vmatpush1.bf16.msra.mxu0 %v384
    %525 = vmatprep.subr.bf16.mxu0 0
    %526 = vmatpush1.bf16.msra.mxu0 %v385
    %527 = vmatprep.subr.bf16.mxu0 0
    %528 = vmatpush1.bf16.msra.mxu0 %v386
    %529 = vmatprep.subr.bf16.mxu0 0
    %530 = vmatpush1.bf16.msra.mxu0 %v387
    %531 = vmatprep.subr.bf16.mxu0 0
    %532 = vmatpush1.bf16.msra.mxu0 %v388
    %533 = vmatprep.subr.bf16.mxu0 0
    %534 = vmatpush1.bf16.msra.mxu0 %v389
    %535 = vmatprep.subr.bf16.mxu0 0
    %536 = vmatpush1.bf16.msra.mxu0 %v390
    %537 = vmatprep.subr.bf16.mxu0 0
    %538 = vmatpush1.bf16.msra.mxu0 %v391
    %539 = vmatprep.subr.bf16.mxu0 0
    %540 = vmatpush1.bf16.msra.mxu0 %v392
    %541 = vmatprep.subr.bf16.mxu0 0
    %542 = vmatpush1.bf16.msra.mxu0 %v393
    %543 = vmatprep.subr.bf16.mxu0 0
    %544 = vmatpush1.bf16.msra.mxu0 %v394
    %545 = vmatprep.mubr.bf16.mxu0 %v52
    %546 = vmatmul.mubr.bf16.gmra.mrb[0].mxu0 %v51
    %v547 = vpop.f32.mrb[0].mxu0
    %v548 = vadd.f32 %v508, %v547
    %v549 = vpop.f32.mrb[0].mxu0
    %v550 = vpop.f32.mrb[0].mxu0
    %v551 = vpop.f32.mrb[0].mxu0
    %552 = vdwg.mxu0
    %553 = vmatprep.subr.bf16.mxu0 0
    %554 = vmatpush1.bf16.msra.mxu0 %v395
    %555 = vmatprep.subr.bf16.mxu0 0
    %556 = vmatpush1.bf16.msra.mxu0 %v396
    %557 = vmatprep.subr.bf16.mxu0 0
    %558 = vmatpush1.bf16.msra.mxu0 %v397
    %559 = vmatprep.subr.bf16.mxu0 0
    %560 = vmatpush1.bf16.msra.mxu0 %v398
    %561 = vmatprep.subr.bf16.mxu0 0
    %562 = vmatpush1.bf16.msra.mxu0 %v399
    %563 = vmatprep.subr.bf16.mxu0 0
    %564 = vmatpush1.bf16.msra.mxu0 %v400
    %565 = vmatprep.subr.bf16.mxu0 0
    %566 = vmatpush1.bf16.msra.mxu0 %v401
    %567 = vmatprep.subr.bf16.mxu0 0
    %568 = vmatpush1.bf16.msra.mxu0 %v402
    %569 = vmatprep.subr.bf16.mxu0 0
    %570 = vmatpush1.bf16.msra.mxu0 %v403
    %571 = vmatprep.subr.bf16.mxu0 0
    %572 = vmatpush1.bf16.msra.mxu0 %v404
    %573 = vmatprep.subr.bf16.mxu0 0
    %574 = vmatpush1.bf16.msra.mxu0 %v405
    %575 = vmatprep.subr.bf16.mxu0 0
    %576 = vmatpush1.bf16.msra.mxu0 %v406
    %577 = vmatprep.subr.bf16.mxu0 0
    %578 = vmatpush1.bf16.msra.mxu0 %v407
    %579 = vmatprep.subr.bf16.mxu0 0
    %580 = vmatpush1.bf16.msra.mxu0 %v408
    %581 = vmatprep.subr.bf16.mxu0 0
    %582 = vmatpush1.bf16.msra.mxu0 %v409
    %583 = vmatprep.subr.bf16.mxu0 0
    %584 = vmatpush1.bf16.msra.mxu0 %v410
    %585 = vmatprep.mubr.bf16.mxu0 %v54
    %586 = vmatmul.mubr.bf16.gmra.mrb[0].mxu0 %v53
    %v587 = vpop.f32.mrb[0].mxu0
    %v588 = vadd.f32 %v548, %v587
    %v589 = vpop.f32.mrb[0].mxu0
    %v590 = vpop.f32.mrb[0].mxu0
    %v591 = vpop.f32.mrb[0].mxu0
    %592 = vdwg.mxu0
    %593 = vmatprep.subr.bf16.mxu0 0
    %594 = vmatpush1.bf16.msra.mxu0 %v411
    %595 = vmatprep.subr.bf16.mxu0 0
    %596 = vmatpush1.bf16.msra.mxu0 %v471
    %597 = vmatprep.subr.bf16.mxu0 0
    %598 = vmatpush1.bf16.msra.mxu0 0
    %599 = vmatprep.subr.bf16.mxu0 0
    %600 = vmatpush1.bf16.msra.mxu0 0
    %601 = vmatprep.subr.bf16.mxu0 0
    %602 = vmatpush1.bf16.msra.mxu0 0
    %603 = vmatprep.subr.bf16.mxu0 0
    %604 = vmatpush1.bf16.msra.mxu0 0
    %605 = vmatprep.subr.bf16.mxu0 0
    %606 = vmatpush1.bf16.msra.mxu0 0
    %607 = vmatprep.subr.bf16.mxu0 0
    %608 = vmatpush1.bf16.msra.mxu0 0
    %609 = vmatprep.subr.bf16.mxu0 0
    %610 = vmatpush1.bf16.msra.mxu0 0
    %611 = vmatprep.subr.bf16.mxu0 0
    %612 = vmatpush1.bf16.msra.mxu0 0
    %613 = vmatprep.subr.bf16.mxu0 0
    %614 = vmatpush1.bf16.msra.mxu0 0
    %615 = vmatprep.subr.bf16.mxu0 0
    %616 = vmatpush1.bf16.msra.mxu0 0
    %617 = vmatprep.subr.bf16.mxu0 0
    %618 = vmatpush1.bf16.msra.mxu0 0
    %619 = vmatprep.subr.bf16.mxu0 0
    %620 = vmatpush1.bf16.msra.mxu0 0
    %621 = vmatprep.subr.bf16.mxu0 0
    %622 = vmatpush1.bf16.msra.mxu0 0
    %623 = vmatprep.subr.bf16.mxu0 0
    %624 = vmatpush1.bf16.msra.mxu0 0
    %625 = vmatprep.mubr.bf16.mxu0 0
    %626 = vmatmul.mubr.bf16.gmra.mrb[0].mxu0 %v464
    %v627 = vpop.f32.mrb[0].mxu0
    %v628 = vadd.f32 %v588, %v627
    %v629 = vpop.f32.mrb[0].mxu0
    %v630 = vpop.f32.mrb[0].mxu0
    %v631 = vpop.f32.mrb[0].mxu0
    %632 = vdwg.mxu0
    %v633 = vmax.f32 %v628, 0.0
    %v634 = vpack.c.bf16 %v633, %v633
    %v635 = vld [vmem:[%s3] sm:$0xf]
    %v636 = vld [vmem:[%s3 + $0x4] sm:$0xf]
    %v637 = vld [vmem:[%s3 + $0x8] sm:$0xf]
    %v638 = vld [vmem:[%s3 + $0xc] sm:$0xf]
    %v639 = vld [vmem:[%s3 + $0x10] sm:$0xf]
    %v640 = vld [vmem:[%s3 + $0x14] sm:$0xf]
    %v641 = vld [vmem:[%s3 + $0x18] sm:$0xf]
    %v642 = vld [vmem:[%s3 + $0x1c] sm:$0xf]
    %v643 = vld [vmem:[%s3 + $0x20] sm:$0xf]
    %v644 = vld [vmem:[%s3 + $0x24] sm:$0xf]
    %v645 = vld [vmem:[%s3 + $0x28] sm:$0xf]
    %v646 = vld [vmem:[%s3 + $0x2c] sm:$0xf]
    %v647 = vld [vmem:[%s3 + $0x30] sm:$0xf]
    %v648 = vld [vmem:[%s3 + $0x34] sm:$0xf]
    %v649 = vld [vmem:[%s3 + $0x38] sm:$0xf]
    %v650 = vld [vmem:[%s3 + $0x3c] sm:$0xf]
    %v651 = vld [vmem:[%s4] sm:$0x1]
    %v653 = vlaneseq
    %v654 = vshrl.u32 %v653, 7
    %v655 = vsub.s32 0, %v654
    %v656 = vrot.slane %v651, %v655
    %v674 = vunpack.c.l.b16 %v635
    %v675 = vunpack.c.l.b16 %v636
    %v676 = vunpack.c.l.b16 %v637
    %v677 = vunpack.c.l.b16 %v638
    %v678 = vunpack.c.l.b16 %v639
    %v679 = vunpack.c.l.b16 %v640
    %v680 = vunpack.c.l.b16 %v641
    %v681 = vunpack.c.l.b16 %v642
    %v682 = vunpack.c.l.b16 %v643
    %v683 = vunpack.c.l.b16 %v644
    %v684 = vunpack.c.l.b16 %v645
    %v685 = vunpack.c.l.b16 %v646
    %v686 = vunpack.c.l.b16 %v647
    %v687 = vunpack.c.l.b16 %v648
    %v688 = vunpack.c.l.b16 %v649
    %v689 = vunpack.c.l.b16 %v650
    %v690 = vpack.c.b16 %v675, %v674
    %v691 = vpack.c.b16 %v677, %v676
    %v692 = vpack.c.b16 %v679, %v678
    %v693 = vpack.c.b16 %v681, %v680
    %v694 = vpack.c.b16 %v683, %v682
    %v695 = vpack.c.b16 %v685, %v684
    %v696 = vpack.c.b16 %v687, %v686
    %v697 = vpack.c.b16 %v689, %v688
    %706 = vmatprep.subr.bf16.mxu0 0
    %707 = vmatpush1.bf16.msra.mxu0 %v690
    %708 = vmatprep.subr.bf16.mxu0 0
    %709 = vmatpush1.bf16.msra.mxu0 %v691
    %710 = vmatprep.subr.bf16.mxu0 0
    %711 = vmatpush1.bf16.msra.mxu0 %v692
    %712 = vmatprep.subr.bf16.mxu0 0
    %713 = vmatpush1.bf16.msra.mxu0 %v693
    %714 = vmatprep.subr.bf16.mxu0 0
    %715 = vmatpush1.bf16.msra.mxu0 %v694
    %716 = vmatprep.subr.bf16.mxu0 0
    %717 = vmatpush1.bf16.msra.mxu0 %v695
    %718 = vmatprep.subr.bf16.mxu0 0
    %719 = vmatpush1.bf16.msra.mxu0 %v696
    %720 = vmatprep.subr.bf16.mxu0 0
    %721 = vmatpush1.bf16.msra.mxu0 %v697
    %722 = vmatprep.subr.bf16.mxu0 0
    %723 = vmatpush1.bf16.msra.mxu0 0
    %724 = vmatprep.subr.bf16.mxu0 0
    %725 = vmatpush1.bf16.msra.mxu0 0
    %726 = vmatprep.subr.bf16.mxu0 0
    %727 = vmatpush1.bf16.msra.mxu0 0
    %728 = vmatprep.subr.bf16.mxu0 0
    %729 = vmatpush1.bf16.msra.mxu0 0
    %730 = vmatprep.subr.bf16.mxu0 0
    %731 = vmatpush1.bf16.msra.mxu0 0
    %732 = vmatprep.subr.bf16.mxu0 0
    %733 = vmatpush1.bf16.msra.mxu0 0
    %734 = vmatprep.subr.bf16.mxu0 0
    %735 = vmatpush1.bf16.msra.mxu0 0
    %736 = vmatprep.subr.bf16.mxu0 0
    %737 = vmatpush1.bf16.msra.mxu0 0
    %738 = vmatprep.mubr.bf16.mxu0 0
    %739 = vmatmul.mubr.bf16.gmra.mrb[0].mxu0 %v634
    %v740 = vpop.f32.mrb[0].mxu0
    %v741 = vadd.f32 %v656, %v740
    %v742 = vpop.f32.mrb[0].mxu0
    %v743 = vpop.f32.mrb[0].mxu0
    %v744 = vpop.f32.mrb[0].mxu0
    %745 = vdwg.mxu0
    %v746 = vmax.f32 %v741, 0.0
    %v747 = vpack.c.bf16 %v746, %v746
    %v748 = vld [vmem:[%s5] sm:$0xf]
    %v749 = vld [vmem:[%s5 + $0x4] sm:$0xf]
    %v750 = vld [vmem:[%s5 + $0x8] sm:$0xf]
    %v751 = vld [vmem:[%s5 + $0xc] sm:$0xf]
    %v752 = vld [vmem:[%s5 + $0x10] sm:$0xf]
    %v753 = vld [vmem:[%s5 + $0x14] sm:$0xf]
    %v754 = vld [vmem:[%s5 + $0x18] sm:$0xf]
    %v755 = vld [vmem:[%s5 + $0x1c] sm:$0xf]
    %v756 = vld [vmem:[%s6] sm:$0x1]
    %v758 = vlaneseq
    %v759 = vshrl.u32 %v758, 7
    %v760 = vsub.s32 0, %v759
    %v761 = vrot.slane %v756, %v760
    %v771 = vunpack.c.l.b16 %v748
    %v772 = vunpack.c.l.b16 %v749
    %v773 = vunpack.c.l.b16 %v750
    %v774 = vunpack.c.l.b16 %v751
    %v775 = vunpack.c.l.b16 %v752
    %v776 = vunpack.c.l.b16 %v753
    %v777 = vunpack.c.l.b16 %v754
    %v778 = vunpack.c.l.b16 %v755
    %v779 = vpack.c.b16 %v772, %v771
    %v780 = vpack.c.b16 %v774, %v773
    %v781 = vpack.c.b16 %v776, %v775
    %v782 = vpack.c.b16 %v778, %v777
    %vm787 = vcmask 523264
    %v789 = vsel %vm787, %v747, 0
    %791 = vmatprep.subr.bf16.mxu0 0
    %792 = vmatpush1.bf16.msra.mxu0 %v779
    %793 = vmatprep.subr.bf16.mxu0 0
    %794 = vmatpush1.bf16.msra.mxu0 %v780
    %795 = vmatprep.subr.bf16.mxu0 0
    %796 = vmatpush1.bf16.msra.mxu0 %v781
    %797 = vmatprep.subr.bf16.mxu0 0
    %798 = vmatpush1.bf16.msra.mxu0 %v782
    %799 = vmatprep.subr.bf16.mxu0 0
    %800 = vmatpush1.bf16.msra.mxu0 0
    %801 = vmatprep.subr.bf16.mxu0 0
    %802 = vmatpush1.bf16.msra.mxu0 0
    %803 = vmatprep.subr.bf16.mxu0 0
    %804 = vmatpush1.bf16.msra.mxu0 0
    %805 = vmatprep.subr.bf16.mxu0 0
    %806 = vmatpush1.bf16.msra.mxu0 0
    %807 = vmatprep.subr.bf16.mxu0 0
    %808 = vmatpush1.bf16.msra.mxu0 0
    %809 = vmatprep.subr.bf16.mxu0 0
    %810 = vmatpush1.bf16.msra.mxu0 0
    %811 = vmatprep.subr.bf16.mxu0 0
    %812 = vmatpush1.bf16.msra.mxu0 0
    %813 = vmatprep.subr.bf16.mxu0 0
    %814 = vmatpush1.bf16.msra.mxu0 0
    %815 = vmatprep.subr.bf16.mxu0 0
    %816 = vmatpush1.bf16.msra.mxu0 0
    %817 = vmatprep.subr.bf16.mxu0 0
    %818 = vmatpush1.bf16.msra.mxu0 0
    %819 = vmatprep.subr.bf16.mxu0 0
    %820 = vmatpush1.bf16.msra.mxu0 0
    %821 = vmatprep.subr.bf16.mxu0 0
    %822 = vmatpush1.bf16.msra.mxu0 0
    %823 = vmatprep.mubr.bf16.mxu0 0
    %824 = vmatmul.mubr.bf16.gmra.mrb[0].mxu0 %v789
    %v825 = vpop.f32.mrb[0].mxu0
    %v826 = vadd.f32 %v761, %v825
    %v827 = vpop.f32.mrb[0].mxu0
    %v828 = vpop.f32.mrb[0].mxu0
    %v829 = vpop.f32.mrb[0].mxu0
    %830 = vdwg.mxu0
    %831 = vst [vmem:[#allocation5] sm:$0xff] %v826
    // Predicated region
    $region34: #{tpu_custom_call.1} parent=1 // pred_check
      _
    $region35: #{tpu_custom_call.1} parent=1 // pred_check_branch
      %833 = sbr.rel (0) target = $region37
    $region36: #{tpu_custom_call.1} parent=1 // pred_region
      %s835 = ssub.s32 128, 128
      %836 = vsyncadd [#allocation4], %s835
      %s838 = sshll.u32 [#allocation5], 4
      %s839 = int_to_ptr.vmem [resolvable:$true] %s838
      %841 = dma.vmem_to_hbm [thread:$0]  %s839, 128, %s7, [#allocation4]
    $region37: #{tpu_custom_call.1} parent=1 // pred_fallthru
      _
    // Predicated region
    $region38: #{tpu_custom_call.1} parent=1 // pred_check
      _
    $region39: #{tpu_custom_call.1} parent=1 // pred_check_branch
      %843 = sbr.rel (0) target = $region41
    $region40: #{tpu_custom_call.1} parent=1 // pred_region
      %844 = dma.done [#allocation4], 128
    $region41: #{tpu_custom_call.1} parent=1 // pred_fallthru
      _
    %845 = vsyncpa [#allocation3], 1
    %846 = vsyncpa [#allocation4], 1

// kernel: tpu_custom_call.1
$region0: #{tpu_custom_call.1}
  #allocation0 [shape = 'u32[]', space=smem, size = 0x4, offset = 0x4, fixed_abs, tag = 'smem constant byte address 0x4 - core index']
  #allocation1 [shape = 'u32[144,128]{1,0:T(1,128)}', space=vmem, size = 0x12000, scoped, tag = 'internal scratch']
  %s0 = inlined_call_operand.vmem [shape: f32[8,896], index: 0, kind: input, shape index: {}]
  %s1 = inlined_call_operand.hbm [shape: bf16[896,128], index: 1, kind: input, shape index: {}]
  %s2 = inlined_call_operand.vmem [shape: f32[1,128], index: 2, kind: input, shape index: {}]
  %s3 = inlined_call_operand.vmem [shape: bf16[128,64], index: 3, kind: input, shape index: {}]
  %s4 = inlined_call_operand.vmem [shape: f32[1,64], index: 4, kind: input, shape index: {}]
  %s5 = inlined_call_operand.vmem [shape: bf16[64,128], index: 5, kind: input, shape index: {}]
  %s6 = inlined_call_operand.vmem [shape: f32[1,128], index: 6, kind: input, shape index: {}]
  %s7 = inlined_call_operand.hbm [shape: f32[8,128], index: 7, kind: output, shape index: {}]
  %s8 = sld [smem:[#allocation0]]
  $region42: #{tpu_custom_call.1} parent=0
    _
  %s10 = ssub.s32 1, %s8
  %s11 = scalar_select 0, %s10, %s8
  $region1: #{tpu_custom_call.1} parent=0
    #allocation2 [shape = 'u8[229376]{0}', space=vmem, size = 0x38000, scoped, tag = 'input window, operand 1, single buffered']
    #allocation3 [shape = 's32[1]{0}', space=sflag, size = 0x4, scoped, tag = 'scoped memory for tpu_custom_call.1']
    #allocation4 [shape = 's32[1]{0}', space=sflag, size = 0x4, scoped, tag = 'scoped memory for tpu_custom_call.1']
    #allocation5 [shape = 'u8[4096]{0}', space=vmem, size = 0x1000, scoped, tag = 'output window, operand 0, single buffered']
    %12 = vsyncpa [#allocation3], 0
    %13 = vsyncpa [#allocation4], 0
    // Predicated region
    $region2: #{tpu_custom_call.1} parent=1 // pred_check
      _
    $region3: #{tpu_custom_call.1} parent=1 // pred_check_branch
      %15 = sbr.rel (0) target = $region5
    $region4: #{tpu_custom_call.1} parent=1 // pred_region
      _
    $region5: #{tpu_custom_call.1} parent=1 // pred_fallthru
      _
    // Predicated region
    $region6: #{tpu_custom_call.1} parent=1 // pred_check
      _
    $region7: #{tpu_custom_call.1} parent=1 // pred_check_branch
      %17 = sbr.rel (0) target = $region9
    $region8: #{tpu_custom_call.1} parent=1 // pred_region
      %s19 = ssub.s32 7168, 7168
      %20 = vsyncadd [#allocation3], %s19
      %s21 = sshll.u32 [#allocation2], 4
      %s22 = int_to_ptr.vmem [resolvable:$true] %s21
      %27 = dma.hbm_to_vmem [thread:$0]  %s1, 7168, %s22, [#allocation3], 64, 64, 4
    $region9: #{tpu_custom_call.1} parent=1 // pred_fallthru
      _
    // Predicated region
    $region10: #{tpu_custom_call.1} parent=1 // pred_check
      _
    $region11: #{tpu_custom_call.1} parent=1 // pred_check_branch
      %29 = sbr.rel (0) target = $region13
    $region12: #{tpu_custom_call.1} parent=1 // pred_region
      _
    $region13: #{tpu_custom_call.1} parent=1 // pred_fallthru
      _
    // Predicated region
    $region14: #{tpu_custom_call.1} parent=1 // pred_check
      _
    $region15: #{tpu_custom_call.1} parent=1 // pred_check_branch
      %31 = sbr.rel (0) target = $region17
    $region16: #{tpu_custom_call.1} parent=1 // pred_region
      _
    $region17: #{tpu_custom_call.1} parent=1 // pred_fallthru
      _
    // Predicated region
    $region18: #{tpu_custom_call.1} parent=1 // pred_check
      _
    $region19: #{tpu_custom_call.1} parent=1 // pred_check_branch
      %33 = sbr.rel (0) target = $region21
    $region20: #{tpu_custom_call.1} parent=1 // pred_region
      _
    $region21: #{tpu_custom_call.1} parent=1 // pred_fallthru
      _
    // Predicated region
    $region22: #{tpu_custom_call.1} parent=1 // pred_check
      _
    $region23: #{tpu_custom_call.1} parent=1 // pred_check_branch
      %35 = sbr.rel (0) target = $region25
    $region24: #{tpu_custom_call.1} parent=1 // pred_region
      _
    $region25: #{tpu_custom_call.1} parent=1 // pred_fallthru
      _
    // Predicated region
    $region26: #{tpu_custom_call.1} parent=1 // pred_check
      _
    $region27: #{tpu_custom_call.1} parent=1 // pred_check_branch
      %37 = sbr.rel (0) target = $region29
    $region28: #{tpu_custom_call.1} parent=1 // pred_region
      _
    $region29: #{tpu_custom_call.1} parent=1 // pred_fallthru
      _
    // Predicated region
    $region30: #{tpu_custom_call.1} parent=1 // pred_check
      _
    $region31: #{tpu_custom_call.1} parent=1 // pred_check_branch
      %39 = sbr.rel (0) target = $region33
    $region32: #{tpu_custom_call.1} parent=1 // pred_region
      %40 = dma.done [#allocation3], 7168
    $region33: #{tpu_custom_call.1} parent=1 // pred_fallthru
      _
    %v42 = vld [vmem:[%s0] sm:$0xff]
    %v43 = vld [vmem:[%s0 + $0x8] sm:$0xff]
    %v44 = vld [vmem:[%s0 + $0x10] sm:$0xff]
    %v45 = vld [vmem:[%s0 + $0x18] sm:$0xff]
    %v46 = vld [vmem:[%s0 + $0x20] sm:$0xff]
    %v47 = vld [vmem:[%s0 + $0x28] sm:$0xff]
    %v48 = vld [vmem:[%s0 + $0x30] sm:$0xff]
    %v49 = vpack.c.bf16 %v42, %v42
    %v50 = vpack.c.bf16 %v43, %v43
    %v51 = vpack.c.bf16 %v44, %v44
    %v52 = vpack.c.bf16 %v45, %v45
    %v53 = vpack.c.bf16 %v46, %v46
    %v54 = vpack.c.bf16 %v47, %v47
    %v55 = vpack.c.bf16 %v48, %v48
    %v56 = vld [vmem:[#allocation2] sm:$0xf]
    %v57 = vld [vmem:[#allocation2 + $0x4] sm:$0xf]
    %v58 = vld [vmem:[#allocation2 + $0x8] sm:$0xf]
    %v59 = vld [vmem:[#allocation2 + $0xc] sm:$0xf]
    %v60 = vld [vmem:[#allocation2 + $0x10] sm:$0xf]
    %v61 = vld [vmem:[#allocation2 + $0x14] sm:$0xf]
    %v62 = vld [vmem:[#allocation2 + $0x18] sm:$0xf]
    %v63 = vld [vmem:[#allocation2 + $0x1c] sm:$0xf]
    %v64 = vld [vmem:[#allocation2 + $0x20] sm:$0xf]
    %v65 = vld [vmem:[#allocation2 + $0x24] sm:$0xf]
    %v66 = vld [vmem:[#allocation2 + $0x28] sm:$0xf]
    %v67 = vld [vmem:[#allocation2 + $0x2c] sm:$0xf]
    %v68 = vld [vmem:[#allocation2 + $0x30] sm:$0xf]
    %v69 = vld [vmem:[#allocation2 + $0x34] sm:$0xf]
    %v70 = vld [vmem:[#allocation2 + $0x38] sm:$0xf]
    %v71 = vld [vmem:[#allocation2 + $0x3c] sm:$0xf]
    %v72 = vld [vmem:[#allocation2 + $0x40] sm:$0xf]
    %v73 = vld [vmem:[#allocation2 + $0x44] sm:$0xf]
    %v74 = vld [vmem:[#allocation2 + $0x48] sm:$0xf]
    %v75 = vld [vmem:[#allocation2 + $0x4c] sm:$0xf]
    %v76 = vld [vmem:[#allocation2 + $0x50] sm:$0xf]
    %v77 = vld [vmem:[#allocation2 + $0x54] sm:$0xf]
    %v78 = vld [vmem:[#allocation2 + $0x58] sm:$0xf]
    %v79 = vld [vmem:[#allocation2 + $0x5c] sm:$0xf]
    %v80 = vld [vmem:[#allocation2 + $0x60] sm:$0xf]
    %v81 = vld [vmem:[#allocation2 + $0x64] sm:$0xf]
    %v82 = vld [vmem:[#allocation2 + $0x68] sm:$0xf]
    %v83 = vld [vmem:[#allocation2 + $0x6c] sm:$0xf]
    %v84 = vld [vmem:[#allocation2 + $0x70] sm:$0xf]
    %v85 = vld [vmem:[#allocation2 + $0x74] sm:$0xf]
    %v86 = vld [vmem:[#allocation2 + $0x78] sm:$0xf]
    %v87 = vld [vmem:[#allocation2 + $0x7c] sm:$0xf]
    %v88 = vld [vmem:[#allocation2 + $0x80] sm:$0xf]
    %v89 = vld [vmem:[#allocation2 + $0x84] sm:$0xf]
    %v90 = vld [vmem:[#allocation2 + $0x88] sm:$0xf]
    %v91 = vld [vmem:[#allocation2 + $0x8c] sm:$0xf]
    %v92 = vld [vmem:[#allocation2 + $0x90] sm:$0xf]
    %v93 = vld [vmem:[#allocation2 + $0x94] sm:$0xf]
    %v94 = vld [vmem:[#allocation2 + $0x98] sm:$0xf]
    %v95 = vld [vmem:[#allocation2 + $0x9c] sm:$0xf]
    %v96 = vld [vmem:[#allocation2 + $0xa0] sm:$0xf]
    %v97 = vld [vmem:[#allocation2 + $0xa4] sm:$0xf]
    %v98 = vld [vmem:[#allocation2 + $0xa8] sm:$0xf]
    %v99 = vld [vmem:[#allocation2 + $0xac] sm:$0xf]
    %v100 = vld [vmem:[#allocation2 + $0xb0] sm:$0xf]
    %v101 = vld [vmem:[#allocation2 + $0xb4] sm:$0xf]
    %v102 = vld [vmem:[#allocation2 + $0xb8] sm:$0xf]
    %v103 = vld [vmem:[#allocation2 + $0xbc] sm:$0xf]
    %v104 = vld [vmem:[#allocation2 + $0xc0] sm:$0xf]
    %v105 = vld [vmem:[#allocation2 + $0xc4] sm:$0xf]
    %v106 = vld [vmem:[#allocation2 + $0xc8] sm:$0xf]
    %v107 = vld [vmem:[#allocation2 + $0xcc] sm:$0xf]
    %v108 = vld [vmem:[#allocation2 + $0xd0] sm:$0xf]
    %v109 = vld [vmem:[#allocation2 + $0xd4] sm:$0xf]
    %v110 = vld [vmem:[#allocation2 + $0xd8] sm:$0xf]
    %v111 = vld [vmem:[#allocation2 + $0xdc] sm:$0xf]
    %v112 = vld [vmem:[#allocation2 + $0xe0] sm:$0xf]
    %v113 = vld [vmem:[#allocation2 + $0xe4] sm:$0xf]
    %v114 = vld [vmem:[#allocation2 + $0xe8] sm:$0xf]
    %v115 = vld [vmem:[#allocation2 + $0xec] sm:$0xf]
    %v116 = vld [vmem:[#allocation2 + $0xf0] sm:$0xf]
    %v117 = vld [vmem:[#allocation2 + $0xf4] sm:$0xf]
    %v118 = vld [vmem:[#allocation2 + $0xf8] sm:$0xf]
    %v119 = vld [vmem:[#allocation2 + $0xfc] sm:$0xf]
    %v120 = vld [vmem:[#allocation2 + $0x100] sm:$0xf]
    %v121 = vld [vmem:[#allocation2 + $0x104] sm:$0xf]
    %v122 = vld [vmem:[#allocation2 + $0x108] sm:$0xf]
    %v123 = vld [vmem:[#allocation2 + $0x10c] sm:$0xf]
    %v124 = vld [vmem:[#allocation2 + $0x110] sm:$0xf]
    %v125 = vld [vmem:[#allocation2 + $0x114] sm:$0xf]
    %v126 = vld [vmem:[#allocation2 + $0x118] sm:$0xf]
    %v127 = vld [vmem:[#allocation2 + $0x11c] sm:$0xf]
    %v128 = vld [vmem:[#allocation2 + $0x120] sm:$0xf]
    %v129 = vld [vmem:[#allocation2 + $0x124] sm:$0xf]
    %v130 = vld [vmem:[#allocation2 + $0x128] sm:$0xf]
    %v131 = vld [vmem:[#allocation2 + $0x12c] sm:$0xf]
    %v132 = vld [vmem:[#allocation2 + $0x130] sm:$0xf]
    %v133 = vld [vmem:[#allocation2 + $0x134] sm:$0xf]
    %v134 = vld [vmem:[#allocation2 + $0x138] sm:$0xf]
    %v135 = vld [vmem:[#allocation2 + $0x13c] sm:$0xf]
    %v136 = vld [vmem:[#allocation2 + $0x140] sm:$0xf]
    %v137 = vld [vmem:[#allocation2 + $0x144] sm:$0xf]
    %v138 = vld [vmem:[#allocation2 + $0x148] sm:$0xf]
    %v139 = vld [vmem:[#allocation2 + $0x14c] sm:$0xf]
    %v140 = vld [vmem:[#allocation2 + $0x150] sm:$0xf]
    %v141 = vld [vmem:[#allocation2 + $0x154] sm:$0xf]
    %v142 = vld [vmem:[#allocation2 + $0x158] sm:$0xf]
    %v143 = vld [vmem:[#allocation2 + $0x15c] sm:$0xf]
    %v144 = vld [vmem:[#allocation2 + $0x160] sm:$0xf]
    %v145 = vld [vmem:[#allocation2 + $0x164] sm:$0xf]
    %v146 = vld [vmem:[#allocation2 + $0x168] sm:$0xf]
    %v147 = vld [vmem:[#allocation2 + $0x16c] sm:$0xf]
    %v148 = vld [vmem:[#allocation2 + $0x170] sm:$0xf]
    %v149 = vld [vmem:[#allocation2 + $0x174] sm:$0xf]
    %v150 = vld [vmem:[#allocation2 + $0x178] sm:$0xf]
    %v151 = vld [vmem:[#allocation2 + $0x17c] sm:$0xf]
    %v152 = vld [vmem:[#allocation2 + $0x180] sm:$0xf]
    %v153 = vld [vmem:[#allocation2 + $0x184] sm:$0xf]
    %v154 = vld [vmem:[#allocation2 + $0x188] sm:$0xf]
    %v155 = vld [vmem:[#allocation2 + $0x18c] sm:$0xf]
    %v156 = vld [vmem:[#allocation2 + $0x190] sm:$0xf]
    %v157 = vld [vmem:[#allocation2 + $0x194] sm:$0xf]
    %v158 = vld [vmem:[#allocation2 + $0x198] sm:$0xf]
    %v159 = vld [vmem:[#allocation2 + $0x19c] sm:$0xf]
    %v160 = vld [vmem:[#allocation2 + $0x1a0] sm:$0xf]
    %v161 = vld [vmem:[#allocation2 + $0x1a4] sm:$0xf]
    %v162 = vld [vmem:[#allocation2 + $0x1a8] sm:$0xf]
    %v163 = vld [vmem:[#allocation2 + $0x1ac] sm:$0xf]
    %v164 = vld [vmem:[#allocation2 + $0x1b0] sm:$0xf]
    %v165 = vld [vmem:[#allocation2 + $0x1b4] sm:$0xf]
    %v166 = vld [vmem:[#allocation2 + $0x1b8] sm:$0xf]
    %v167 = vld [vmem:[#allocation2 + $0x1bc] sm:$0xf]
    %v168 = vld [vmem:[%s2] sm:$0x1]
    %v170 = vlaneseq
    %v171 = vshrl.u32 %v170, 7
    %v172 = vsub.s32 0, %v171
    %v173 = vrot.slane %v168, %v172
    %v287 = vunpack.c.l.b16 %v56
    %v288 = vunpack.c.l.b16 %v57
    %v289 = vunpack.c.l.b16 %v58
    %v290 = vunpack.c.l.b16 %v59
    %v291 = vunpack.c.l.b16 %v60
    %v292 = vunpack.c.l.b16 %v61
    %v293 = vunpack.c.l.b16 %v62
    %v294 = vunpack.c.l.b16 %v63
    %v295 = vunpack.c.l.b16 %v64
    %v296 = vunpack.c.l.b16 %v65
    %v297 = vunpack.c.l.b16 %v66
    %v298 = vunpack.c.l.b16 %v67
    %v299 = vunpack.c.l.b16 %v68
    %v300 = vunpack.c.l.b16 %v69
    %v301 = vunpack.c.l.b16 %v70
    %v302 = vunpack.c.l.b16 %v71
    %v303 = vunpack.c.l.b16 %v72
    %v304 = vunpack.c.l.b16 %v73
    %v305 = vunpack.c.l.b16 %v74
    %v306 = vunpack.c.l.b16 %v75
    %v307 = vunpack.c.l.b16 %v76
    %v308 = vunpack.c.l.b16 %v77
    %v309 = vunpack.c.l.b16 %v78
    %v310 = vunpack.c.l.b16 %v79
    %v311 = vunpack.c.l.b16 %v80
    %v312 = vunpack.c.l.b16 %v81
    %v313 = vunpack.c.l.b16 %v82
    %v314 = vunpack.c.l.b16 %v83
    %v315 = vunpack.c.l.b16 %v84
    %v316 = vunpack.c.l.b16 %v85
    %v317 = vunpack.c.l.b16 %v86
    %v318 = vunpack.c.l.b16 %v87
    %v319 = vunpack.c.l.b16 %v88
    %v320 = vunpack.c.l.b16 %v89
    %v321 = vunpack.c.l.b16 %v90
    %v322 = vunpack.c.l.b16 %v91
    %v323 = vunpack.c.l.b16 %v92
    %v324 = vunpack.c.l.b16 %v93
    %v325 = vunpack.c.l.b16 %v94
    %v326 = vunpack.c.l.b16 %v95
    %v327 = vunpack.c.l.b16 %v96
    %v328 = vunpack.c.l.b16 %v97
    %v329 = vunpack.c.l.b16 %v98
    %v330 = vunpack.c.l.b16 %v99
    %v331 = vunpack.c.l.b16 %v100
    %v332 = vunpack.c.l.b16 %v101
    %v333 = vunpack.c.l.b16 %v102
    %v334 = vunpack.c.l.b16 %v103
    %v335 = vunpack.c.l.b16 %v104
    %v336 = vunpack.c.l.b16 %v105
    %v337 = vunpack.c.l.b16 %v106
    %v338 = vunpack.c.l.b16 %v107
    %v339 = vunpack.c.l.b16 %v108
    %v340 = vunpack.c.l.b16 %v109
    %v341 = vunpack.c.l.b16 %v110
    %v342 = vunpack.c.l.b16 %v111
    %v343 = vunpack.c.l.b16 %v112
    %v344 = vunpack.c.l.b16 %v113
    %v345 = vunpack.c.l.b16 %v114
    %v346 = vunpack.c.l.b16 %v115
    %v347 = vunpack.c.l.b16 %v116
    %v348 = vunpack.c.l.b16 %v117
    %v349 = vunpack.c.l.b16 %v118
    %v350 = vunpack.c.l.b16 %v119
    %v351 = vunpack.c.l.b16 %v120
    %v352 = vunpack.c.l.b16 %v121
    %v353 = vunpack.c.l.b16 %v122
    %v354 = vunpack.c.l.b16 %v123
    %v355 = vunpack.c.l.b16 %v124
    %v356 = vunpack.c.l.b16 %v125
    %v357 = vunpack.c.l.b16 %v126
    %v358 = vunpack.c.l.b16 %v127
    %v359 = vunpack.c.l.b16 %v128
    %v360 = vunpack.c.l.b16 %v129
    %v361 = vunpack.c.l.b16 %v130
    %v362 = vunpack.c.l.b16 %v131
    %v363 = vunpack.c.l.b16 %v132
    %v364 = vunpack.c.l.b16 %v133
    %v365 = vunpack.c.l.b16 %v134
    %v366 = vunpack.c.l.b16 %v135
    %v367 = vunpack.c.l.b16 %v136
    %v368 = vunpack.c.l.b16 %v137
    %v369 = vunpack.c.l.b16 %v138
    %v370 = vunpack.c.l.b16 %v139
    %v371 = vunpack.c.l.b16 %v140
    %v372 = vunpack.c.l.b16 %v141
    %v373 = vunpack.c.l.b16 %v142
    %v374 = vunpack.c.l.b16 %v143
    %v375 = vunpack.c.l.b16 %v144
    %v376 = vunpack.c.l.b16 %v145
    %v377 = vunpack.c.l.b16 %v146
    %v378 = vunpack.c.l.b16 %v147
    %v379 = vunpack.c.l.b16 %v148
    %v380 = vunpack.c.l.b16 %v149
    %v381 = vunpack.c.l.b16 %v150
    %v382 = vunpack.c.l.b16 %v151
    %v383 = vunpack.c.l.b16 %v152
    %v384 = vunpack.c.l.b16 %v153
    %v385 = vunpack.c.l.b16 %v154
    %v386 = vunpack.c.l.b16 %v155
    %v387 = vunpack.c.l.b16 %v156
    %v388 = vunpack.c.l.b16 %v157
    %v389 = vunpack.c.l.b16 %v158
    %v390 = vunpack.c.l.b16 %v159
    %v391 = vunpack.c.l.b16 %v160
    %v392 = vunpack.c.l.b16 %v161
    %v393 = vunpack.c.l.b16 %v162
    %v394 = vunpack.c.l.b16 %v163
    %v395 = vunpack.c.l.b16 %v164
    %v396 = vunpack.c.l.b16 %v165
    %v397 = vunpack.c.l.b16 %v166
    %v398 = vunpack.c.l.b16 %v167
    %v399 = vpack.c.b16 %v288, %v287
    %v400 = vpack.c.b16 %v290, %v289
    %v401 = vpack.c.b16 %v292, %v291
    %v402 = vpack.c.b16 %v294, %v293
    %v403 = vpack.c.b16 %v296, %v295
    %v404 = vpack.c.b16 %v298, %v297
    %v405 = vpack.c.b16 %v300, %v299
    %v406 = vpack.c.b16 %v302, %v301
    %v407 = vpack.c.b16 %v304, %v303
    %v408 = vpack.c.b16 %v306, %v305
    %v409 = vpack.c.b16 %v308, %v307
    %v410 = vpack.c.b16 %v310, %v309
    %v411 = vpack.c.b16 %v312, %v311
    %v412 = vpack.c.b16 %v314, %v313
    %v413 = vpack.c.b16 %v316, %v315
    %v414 = vpack.c.b16 %v318, %v317
    %v415 = vpack.c.b16 %v320, %v319
    %v416 = vpack.c.b16 %v322, %v321
    %v417 = vpack.c.b16 %v324, %v323
    %v418 = vpack.c.b16 %v326, %v325
    %v419 = vpack.c.b16 %v328, %v327
    %v420 = vpack.c.b16 %v330, %v329
    %v421 = vpack.c.b16 %v332, %v331
    %v422 = vpack.c.b16 %v334, %v333
    %v423 = vpack.c.b16 %v336, %v335
    %v424 = vpack.c.b16 %v338, %v337
    %v425 = vpack.c.b16 %v340, %v339
    %v426 = vpack.c.b16 %v342, %v341
    %v427 = vpack.c.b16 %v344, %v343
    %v428 = vpack.c.b16 %v346, %v345
    %v429 = vpack.c.b16 %v348, %v347
    %v430 = vpack.c.b16 %v350, %v349
    %v431 = vpack.c.b16 %v352, %v351
    %v432 = vpack.c.b16 %v354, %v353
    %v433 = vpack.c.b16 %v356, %v355
    %v434 = vpack.c.b16 %v358, %v357
    %v435 = vpack.c.b16 %v360, %v359
    %v436 = vpack.c.b16 %v362, %v361
    %v437 = vpack.c.b16 %v364, %v363
    %v438 = vpack.c.b16 %v366, %v365
    %v439 = vpack.c.b16 %v368, %v367
    %v440 = vpack.c.b16 %v370, %v369
    %v441 = vpack.c.b16 %v372, %v371
    %v442 = vpack.c.b16 %v374, %v373
    %v443 = vpack.c.b16 %v376, %v375
    %v444 = vpack.c.b16 %v378, %v377
    %v445 = vpack.c.b16 %v380, %v379
    %v446 = vpack.c.b16 %v382, %v381
    %v447 = vpack.c.b16 %v384, %v383
    %v448 = vpack.c.b16 %v386, %v385
    %v449 = vpack.c.b16 %v388, %v387
    %v450 = vpack.c.b16 %v390, %v389
    %v451 = vpack.c.b16 %v392, %v391
    %v452 = vpack.c.b16 %v394, %v393
    %v453 = vpack.c.b16 %v396, %v395
    %v454 = vpack.c.b16 %v398, %v397
    %511 = vmatprep.subr.bf16.mxu0 0
    %512 = vmatpush1.bf16.msra.mxu0 %v399
    %513 = vmatprep.subr.bf16.mxu0 0
    %514 = vmatpush1.bf16.msra.mxu0 %v400
    %515 = vmatprep.subr.bf16.mxu0 0
    %516 = vmatpush1.bf16.msra.mxu0 %v401
    %517 = vmatprep.subr.bf16.mxu0 0
    %518 = vmatpush1.bf16.msra.mxu0 %v402
    %519 = vmatprep.subr.bf16.mxu0 0
    %520 = vmatpush1.bf16.msra.mxu0 %v403
    %521 = vmatprep.subr.bf16.mxu0 0
    %522 = vmatpush1.bf16.msra.mxu0 %v404
    %523 = vmatprep.subr.bf16.mxu0 0
    %524 = vmatpush1.bf16.msra.mxu0 %v405
    %525 = vmatprep.subr.bf16.mxu0 0
    %526 = vmatpush1.bf16.msra.mxu0 %v406
    %527 = vmatprep.subr.bf16.mxu0 0
    %528 = vmatpush1.bf16.msra.mxu0 %v407
    %529 = vmatprep.subr.bf16.mxu0 0
    %530 = vmatpush1.bf16.msra.mxu0 %v408
    %531 = vmatprep.subr.bf16.mxu0 0
    %532 = vmatpush1.bf16.msra.mxu0 %v409
    %533 = vmatprep.subr.bf16.mxu0 0
    %534 = vmatpush1.bf16.msra.mxu0 %v410
    %535 = vmatprep.subr.bf16.mxu0 0
    %536 = vmatpush1.bf16.msra.mxu0 %v411
    %537 = vmatprep.subr.bf16.mxu0 0
    %538 = vmatpush1.bf16.msra.mxu0 %v412
    %539 = vmatprep.subr.bf16.mxu0 0
    %540 = vmatpush1.bf16.msra.mxu0 %v413
    %541 = vmatprep.subr.bf16.mxu0 0
    %542 = vmatpush1.bf16.msra.mxu0 %v414
    %543 = vmatprep.mubr.bf16.mxu0 %v50
    %544 = vmatmul.mubr.bf16.gmra.mrb[0].mxu0 %v49
    %v545 = vpop.f32.mrb[0].mxu0
    %v546 = vadd.f32 %v173, %v545
    %v547 = vpop.f32.mrb[0].mxu0
    %v548 = vpop.f32.mrb[0].mxu0
    %v549 = vpop.f32.mrb[0].mxu0
    %550 = vdwg.mxu0
    %551 = vmatprep.subr.bf16.mxu0 0
    %552 = vmatpush1.bf16.msra.mxu0 %v415
    %553 = vmatprep.subr.bf16.mxu0 0
    %554 = vmatpush1.bf16.msra.mxu0 %v416
    %555 = vmatprep.subr.bf16.mxu0 0
    %556 = vmatpush1.bf16.msra.mxu0 %v417
    %557 = vmatprep.subr.bf16.mxu0 0
    %558 = vmatpush1.bf16.msra.mxu0 %v418
    %559 = vmatprep.subr.bf16.mxu0 0
    %560 = vmatpush1.bf16.msra.mxu0 %v419
    %561 = vmatprep.subr.bf16.mxu0 0
    %562 = vmatpush1.bf16.msra.mxu0 %v420
    %563 = vmatprep.subr.bf16.mxu0 0
    %564 = vmatpush1.bf16.msra.mxu0 %v421
    %565 = vmatprep.subr.bf16.mxu0 0
    %566 = vmatpush1.bf16.msra.mxu0 %v422
    %567 = vmatprep.subr.bf16.mxu0 0
    %568 = vmatpush1.bf16.msra.mxu0 %v423
    %569 = vmatprep.subr.bf16.mxu0 0
    %570 = vmatpush1.bf16.msra.mxu0 %v424
    %571 = vmatprep.subr.bf16.mxu0 0
    %572 = vmatpush1.bf16.msra.mxu0 %v425
    %573 = vmatprep.subr.bf16.mxu0 0
    %574 = vmatpush1.bf16.msra.mxu0 %v426
    %575 = vmatprep.subr.bf16.mxu0 0
    %576 = vmatpush1.bf16.msra.mxu0 %v427
    %577 = vmatprep.subr.bf16.mxu0 0
    %578 = vmatpush1.bf16.msra.mxu0 %v428
    %579 = vmatprep.subr.bf16.mxu0 0
    %580 = vmatpush1.bf16.msra.mxu0 %v429
    %581 = vmatprep.subr.bf16.mxu0 0
    %582 = vmatpush1.bf16.msra.mxu0 %v430
    %583 = vmatprep.mubr.bf16.mxu0 %v52
    %584 = vmatmul.mubr.bf16.gmra.mrb[0].mxu0 %v51
    %v585 = vpop.f32.mrb[0].mxu0
    %v586 = vadd.f32 %v546, %v585
    %v587 = vpop.f32.mrb[0].mxu0
    %v588 = vpop.f32.mrb[0].mxu0
    %v589 = vpop.f32.mrb[0].mxu0
    %590 = vdwg.mxu0
    %591 = vmatprep.subr.bf16.mxu0 0
    %592 = vmatpush1.bf16.msra.mxu0 %v431
    %593 = vmatprep.subr.bf16.mxu0 0
    %594 = vmatpush1.bf16.msra.mxu0 %v432
    %595 = vmatprep.subr.bf16.mxu0 0
    %596 = vmatpush1.bf16.msra.mxu0 %v433
    %597 = vmatprep.subr.bf16.mxu0 0
    %598 = vmatpush1.bf16.msra.mxu0 %v434
    %599 = vmatprep.subr.bf16.mxu0 0
    %600 = vmatpush1.bf16.msra.mxu0 %v435
    %601 = vmatprep.subr.bf16.mxu0 0
    %602 = vmatpush1.bf16.msra.mxu0 %v436
    %603 = vmatprep.subr.bf16.mxu0 0
    %604 = vmatpush1.bf16.msra.mxu0 %v437
    %605 = vmatprep.subr.bf16.mxu0 0
    %606 = vmatpush1.bf16.msra.mxu0 %v438
    %607 = vmatprep.subr.bf16.mxu0 0
    %608 = vmatpush1.bf16.msra.mxu0 %v439
    %609 = vmatprep.subr.bf16.mxu0 0
    %610 = vmatpush1.bf16.msra.mxu0 %v440
    %611 = vmatprep.subr.bf16.mxu0 0
    %612 = vmatpush1.bf16.msra.mxu0 %v441
    %613 = vmatprep.subr.bf16.mxu0 0
    %614 = vmatpush1.bf16.msra.mxu0 %v442
    %615 = vmatprep.subr.bf16.mxu0 0
    %616 = vmatpush1.bf16.msra.mxu0 %v443
    %617 = vmatprep.subr.bf16.mxu0 0
    %618 = vmatpush1.bf16.msra.mxu0 %v444
    %619 = vmatprep.subr.bf16.mxu0 0
    %620 = vmatpush1.bf16.msra.mxu0 %v445
    %621 = vmatprep.subr.bf16.mxu0 0
    %622 = vmatpush1.bf16.msra.mxu0 %v446
    %623 = vmatprep.mubr.bf16.mxu0 %v54
    %624 = vmatmul.mubr.bf16.gmra.mrb[0].mxu0 %v53
    %v625 = vpop.f32.mrb[0].mxu0
    %v626 = vadd.f32 %v586, %v625
    %v627 = vpop.f32.mrb[0].mxu0
    %v628 = vpop.f32.mrb[0].mxu0
    %v629 = vpop.f32.mrb[0].mxu0
    %630 = vdwg.mxu0
    %631 = vmatprep.subr.bf16.mxu0 0
    %632 = vmatpush1.bf16.msra.mxu0 %v447
    %633 = vmatprep.subr.bf16.mxu0 0
    %634 = vmatpush1.bf16.msra.mxu0 %v448
    %635 = vmatprep.subr.bf16.mxu0 0
    %636 = vmatpush1.bf16.msra.mxu0 %v449
    %637 = vmatprep.subr.bf16.mxu0 0
    %638 = vmatpush1.bf16.msra.mxu0 %v450
    %639 = vmatprep.subr.bf16.mxu0 0
    %640 = vmatpush1.bf16.msra.mxu0 %v451
    %641 = vmatprep.subr.bf16.mxu0 0
    %642 = vmatpush1.bf16.msra.mxu0 %v452
    %643 = vmatprep.subr.bf16.mxu0 0
    %644 = vmatpush1.bf16.msra.mxu0 %v453
    %645 = vmatprep.subr.bf16.mxu0 0
    %646 = vmatpush1.bf16.msra.mxu0 %v454
    %647 = vmatprep.subr.bf16.mxu0 0
    %648 = vmatpush1.bf16.msra.mxu0 0
    %649 = vmatprep.subr.bf16.mxu0 0
    %650 = vmatpush1.bf16.msra.mxu0 0
    %651 = vmatprep.subr.bf16.mxu0 0
    %652 = vmatpush1.bf16.msra.mxu0 0
    %653 = vmatprep.subr.bf16.mxu0 0
    %654 = vmatpush1.bf16.msra.mxu0 0
    %655 = vmatprep.subr.bf16.mxu0 0
    %656 = vmatpush1.bf16.msra.mxu0 0
    %657 = vmatprep.subr.bf16.mxu0 0
    %658 = vmatpush1.bf16.msra.mxu0 0
    %659 = vmatprep.subr.bf16.mxu0 0
    %660 = vmatpush1.bf16.msra.mxu0 0
    %661 = vmatprep.subr.bf16.mxu0 0
    %662 = vmatpush1.bf16.msra.mxu0 0
    %663 = vmatprep.mubr.bf16.mxu0 0
    %664 = vmatmul.mubr.bf16.gmra.mrb[0].mxu0 %v55
    %v665 = vpop.f32.mrb[0].mxu0
    %v666 = vadd.f32 %v626, %v665
    %v667 = vpop.f32.mrb[0].mxu0
    %v668 = vpop.f32.mrb[0].mxu0
    %v669 = vpop.f32.mrb[0].mxu0
    %670 = vdwg.mxu0
    %v671 = vmax.f32 %v666, 0.0
    %v672 = vpack.c.bf16 %v671, %v671
    %v673 = vld [vmem:[%s3] sm:$0xf]
    %v674 = vld [vmem:[%s3 + $0x4] sm:$0xf]
    %v675 = vld [vmem:[%s3 + $0x8] sm:$0xf]
    %v676 = vld [vmem:[%s3 + $0xc] sm:$0xf]
    %v677 = vld [vmem:[%s3 + $0x10] sm:$0xf]
    %v678 = vld [vmem:[%s3 + $0x14] sm:$0xf]
    %v679 = vld [vmem:[%s3 + $0x18] sm:$0xf]
    %v680 = vld [vmem:[%s3 + $0x1c] sm:$0xf]
    %v681 = vld [vmem:[%s3 + $0x20] sm:$0xf]
    %v682 = vld [vmem:[%s3 + $0x24] sm:$0xf]
    %v683 = vld [vmem:[%s3 + $0x28] sm:$0xf]
    %v684 = vld [vmem:[%s3 + $0x2c] sm:$0xf]
    %v685 = vld [vmem:[%s3 + $0x30] sm:$0xf]
    %v686 = vld [vmem:[%s3 + $0x34] sm:$0xf]
    %v687 = vld [vmem:[%s3 + $0x38] sm:$0xf]
    %v688 = vld [vmem:[%s3 + $0x3c] sm:$0xf]
    %v689 = vld [vmem:[%s4] sm:$0x1]
    %v691 = vlaneseq
    %v692 = vshrl.u32 %v691, 7
    %v693 = vsub.s32 0, %v692
    %v694 = vrot.slane %v689, %v693
    %v712 = vunpack.c.l.b16 %v673
    %v713 = vunpack.c.l.b16 %v674
    %v714 = vunpack.c.l.b16 %v675
    %v715 = vunpack.c.l.b16 %v676
    %v716 = vunpack.c.l.b16 %v677
    %v717 = vunpack.c.l.b16 %v678
    %v718 = vunpack.c.l.b16 %v679
    %v719 = vunpack.c.l.b16 %v680
    %v720 = vunpack.c.l.b16 %v681
    %v721 = vunpack.c.l.b16 %v682
    %v722 = vunpack.c.l.b16 %v683
    %v723 = vunpack.c.l.b16 %v684
    %v724 = vunpack.c.l.b16 %v685
    %v725 = vunpack.c.l.b16 %v686
    %v726 = vunpack.c.l.b16 %v687
    %v727 = vunpack.c.l.b16 %v688
    %v728 = vpack.c.b16 %v713, %v712
    %v729 = vpack.c.b16 %v715, %v714
    %v730 = vpack.c.b16 %v717, %v716
    %v731 = vpack.c.b16 %v719, %v718
    %v732 = vpack.c.b16 %v721, %v720
    %v733 = vpack.c.b16 %v723, %v722
    %v734 = vpack.c.b16 %v725, %v724
    %v735 = vpack.c.b16 %v727, %v726
    %744 = vmatprep.subr.bf16.mxu0 0
    %745 = vmatpush1.bf16.msra.mxu0 %v728
    %746 = vmatprep.subr.bf16.mxu0 0
    %747 = vmatpush1.bf16.msra.mxu0 %v729
    %748 = vmatprep.subr.bf16.mxu0 0
    %749 = vmatpush1.bf16.msra.mxu0 %v730
    %750 = vmatprep.subr.bf16.mxu0 0
    %751 = vmatpush1.bf16.msra.mxu0 %v731
    %752 = vmatprep.subr.bf16.mxu0 0
    %753 = vmatpush1.bf16.msra.mxu0 %v732
    %754 = vmatprep.subr.bf16.mxu0 0
    %755 = vmatpush1.bf16.msra.mxu0 %v733
    %756 = vmatprep.subr.bf16.mxu0 0
    %757 = vmatpush1.bf16.msra.mxu0 %v734
    %758 = vmatprep.subr.bf16.mxu0 0
    %759 = vmatpush1.bf16.msra.mxu0 %v735
    %760 = vmatprep.subr.bf16.mxu0 0
    %761 = vmatpush1.bf16.msra.mxu0 0
    %762 = vmatprep.subr.bf16.mxu0 0
    %763 = vmatpush1.bf16.msra.mxu0 0
    %764 = vmatprep.subr.bf16.mxu0 0
    %765 = vmatpush1.bf16.msra.mxu0 0
    %766 = vmatprep.subr.bf16.mxu0 0
    %767 = vmatpush1.bf16.msra.mxu0 0
    %768 = vmatprep.subr.bf16.mxu0 0
    %769 = vmatpush1.bf16.msra.mxu0 0
    %770 = vmatprep.subr.bf16.mxu0 0
    %771 = vmatpush1.bf16.msra.mxu0 0
    %772 = vmatprep.subr.bf16.mxu0 0
    %773 = vmatpush1.bf16.msra.mxu0 0
    %774 = vmatprep.subr.bf16.mxu0 0
    %775 = vmatpush1.bf16.msra.mxu0 0
    %776 = vmatprep.mubr.bf16.mxu0 0
    %777 = vmatmul.mubr.bf16.gmra.mrb[0].mxu0 %v672
    %v778 = vpop.f32.mrb[0].mxu0
    %v779 = vadd.f32 %v694, %v778
    %v780 = vpop.f32.mrb[0].mxu0
    %v781 = vpop.f32.mrb[0].mxu0
    %v782 = vpop.f32.mrb[0].mxu0
    %783 = vdwg.mxu0
    %v784 = vmax.f32 %v779, 0.0
    %v785 = vpack.c.bf16 %v784, %v784
    %v786 = vld [vmem:[%s5] sm:$0xf]
    %v787 = vld [vmem:[%s5 + $0x4] sm:$0xf]
    %v788 = vld [vmem:[%s5 + $0x8] sm:$0xf]
    %v789 = vld [vmem:[%s5 + $0xc] sm:$0xf]
    %v790 = vld [vmem:[%s5 + $0x10] sm:$0xf]
    %v791 = vld [vmem:[%s5 + $0x14] sm:$0xf]
    %v792 = vld [vmem:[%s5 + $0x18] sm:$0xf]
    %v793 = vld [vmem:[%s5 + $0x1c] sm:$0xf]
    %v794 = vld [vmem:[%s6] sm:$0x1]
    %v796 = vlaneseq
    %v797 = vshrl.u32 %v796, 7
    %v798 = vsub.s32 0, %v797
    %v799 = vrot.slane %v794, %v798
    %v809 = vunpack.c.l.b16 %v786
    %v810 = vunpack.c.l.b16 %v787
    %v811 = vunpack.c.l.b16 %v788
    %v812 = vunpack.c.l.b16 %v789
    %v813 = vunpack.c.l.b16 %v790
    %v814 = vunpack.c.l.b16 %v791
    %v815 = vunpack.c.l.b16 %v792
    %v816 = vunpack.c.l.b16 %v793
    %v817 = vpack.c.b16 %v810, %v809
    %v818 = vpack.c.b16 %v812, %v811
    %v819 = vpack.c.b16 %v814, %v813
    %v820 = vpack.c.b16 %v816, %v815
    %vm825 = vcmask 523264
    %v827 = vsel %vm825, %v785, 0
    %829 = vmatprep.subr.bf16.mxu0 0
    %830 = vmatpush1.bf16.msra.mxu0 %v817
    %831 = vmatprep.subr.bf16.mxu0 0
    %832 = vmatpush1.bf16.msra.mxu0 %v818
    %833 = vmatprep.subr.bf16.mxu0 0
    %834 = vmatpush1.bf16.msra.mxu0 %v819
    %835 = vmatprep.subr.bf16.mxu0 0
    %836 = vmatpush1.bf16.msra.mxu0 %v820
    %837 = vmatprep.subr.bf16.mxu0 0
    %838 = vmatpush1.bf16.msra.mxu0 0
    %839 = vmatprep.subr.bf16.mxu0 0
    %840 = vmatpush1.bf16.msra.mxu0 0
    %841 = vmatprep.subr.bf16.mxu0 0
    %842 = vmatpush1.bf16.msra.mxu0 0
    %843 = vmatprep.subr.bf16.mxu0 0
    %844 = vmatpush1.bf16.msra.mxu0 0
    %845 = vmatprep.subr.bf16.mxu0 0
    %846 = vmatpush1.bf16.msra.mxu0 0
    %847 = vmatprep.subr.bf16.mxu0 0
    %848 = vmatpush1.bf16.msra.mxu0 0
    %849 = vmatprep.subr.bf16.mxu0 0
    %850 = vmatpush1.bf16.msra.mxu0 0
    %851 = vmatprep.subr.bf16.mxu0 0
    %852 = vmatpush1.bf16.msra.mxu0 0
    %853 = vmatprep.subr.bf16.mxu0 0
    %854 = vmatpush1.bf16.msra.mxu0 0
    %855 = vmatprep.subr.bf16.mxu0 0
    %856 = vmatpush1.bf16.msra.mxu0 0
    %857 = vmatprep.subr.bf16.mxu0 0
    %858 = vmatpush1.bf16.msra.mxu0 0
    %859 = vmatprep.subr.bf16.mxu0 0
    %860 = vmatpush1.bf16.msra.mxu0 0
    %861 = vmatprep.mubr.bf16.mxu0 0
    %862 = vmatmul.mubr.bf16.gmra.mrb[0].mxu0 %v827
    %v863 = vpop.f32.mrb[0].mxu0
    %v864 = vadd.f32 %v799, %v863
    %v865 = vpop.f32.mrb[0].mxu0
    %v866 = vpop.f32.mrb[0].mxu0
    %v867 = vpop.f32.mrb[0].mxu0
    %868 = vdwg.mxu0
    %869 = vst [vmem:[#allocation5] sm:$0xff] %v864
    // Predicated region
    $region34: #{tpu_custom_call.1} parent=1 // pred_check
      _
    $region35: #{tpu_custom_call.1} parent=1 // pred_check_branch
      %871 = sbr.rel (0) target = $region37
    $region36: #{tpu_custom_call.1} parent=1 // pred_region
      %s873 = ssub.s32 128, 128
      %874 = vsyncadd [#allocation4], %s873
      %s876 = sshll.u32 [#allocation5], 4
      %s877 = int_to_ptr.vmem [resolvable:$true] %s876
      %879 = dma.vmem_to_hbm [thread:$0]  %s877, 128, %s7, [#allocation4]
    $region37: #{tpu_custom_call.1} parent=1 // pred_fallthru
      _
    // Predicated region
    $region38: #{tpu_custom_call.1} parent=1 // pred_check
      _
    $region39: #{tpu_custom_call.1} parent=1 // pred_check_branch
      %881 = sbr.rel (0) target = $region41
    $region40: #{tpu_custom_call.1} parent=1 // pred_region
      %882 = dma.done [#allocation4], 128
    $region41: #{tpu_custom_call.1} parent=1 // pred_fallthru
      _
    %883 = vsyncpa [#allocation3], 1
    %884 = vsyncpa [#allocation4], 1

</llo_original>
